<compile_context>
chip_gen: v7x
topology: tpu7x:2x2x1
jax: 0.10.0
libtpu: 0.0.40
codegen_flags: <defaults>
</compile_context>

<pallas_src>
import functools

import jax
import jax.numpy as jnp
from jax.experimental import pallas as pl
from jax.experimental.pallas import tpu as pltpu


# ---------------------------------------------------------------------------
# Kernel 1: encoder.  grid = (nb, nv); h_acc += nbows_tile @ Wq_tile (bf16 MXU,
# f32 accumulate).  On the last vocab tile: relu + fused [mu|logsigma]
# projection, per-row KL, theta = softmax(mu).
# ---------------------------------------------------------------------------
def etm_encoder_kernel(nbows_ref, wq_ref, bq_ref, wml_ref, bml_ref,
                       theta_ref, kl_ref, h_acc):
    v = pl.program_id(1)

    @pl.when(v == 0)
    def _():
        h_acc[...] = jnp.zeros_like(h_acc)

    h_acc[...] += jnp.dot(nbows_ref[...], wq_ref[...],
                          preferred_element_type=jnp.float32)

    @pl.when(v == pl.num_programs(1) - 1)
    def _():
        h = jnp.maximum(h_acc[...] + bq_ref[...], 0.0)            # (Bt, H) f32
        # TODO(synk): nn.Dropout(enc_drop) on q_theta is identity in eval mode;
        # the training-mode stochastic mask is not reproduced here.
        ml = jnp.dot(h, wml_ref[...],
                     preferred_element_type=jnp.float32) + bml_ref[...]
        k = ml.shape[-1] // 2
        mu = ml[:, :k]
        logsigma = ml[:, k:]
        kl_ref[...] = -0.5 * jnp.sum(
            1.0 + logsigma - mu * mu - jnp.exp(logsigma),
            axis=-1, keepdims=True)
        # TODO(synk): training-mode reparameterization z = mu + eps*exp(0.5*ls)
        # is omitted; eval path uses z = mu.
        z = mu
        ez = jnp.exp(z - jnp.max(z, axis=-1, keepdims=True))
        theta_ref[...] = ez / jnp.sum(ez, axis=-1, keepdims=True)


# ---------------------------------------------------------------------------
# Kernel 2a: beta softmax stats (batch-independent, hoisted out of batch loop).
# Online max / sum-exp over vocab tiles of logit = alphas(K,R) @ rho^T(R,Vt).
# Output refs (K,1) are resident accumulators (constant block index).
# ---------------------------------------------------------------------------
def etm_beta_stats_kernel(alphas_ref, rhot_ref, m_ref, s_ref):
    @pl.when(pl.program_id(0) == 0)
    def _():
        m_ref[...] = jnp.full_like(m_ref, -jnp.inf)
        s_ref[...] = jnp.zeros_like(s_ref)

    logit = jnp.dot(alphas_ref[...], rhot_ref[...],
                    preferred_element_type=jnp.float32)           # (K, Vt) f32
    m_old = m_ref[...]
    m_new = jnp.maximum(m_old, jnp.max(logit, axis=-1, keepdims=True))
    s_ref[...] = s_ref[...] * jnp.exp(m_old - m_new) + jnp.sum(
        jnp.exp(logit - m_new), axis=-1, keepdims=True)
    m_ref[...] = m_new


# ---------------------------------------------------------------------------
# Kernel 2b: materialize lane-dense beta (K, V) in bf16, one vocab tile per step.
# ---------------------------------------------------------------------------
def etm_beta_norm_kernel(alphas_ref, rhot_ref, m_ref, s_ref, beta_ref):
    logit = jnp.dot(alphas_ref[...], rhot_ref[...],
                    preferred_element_type=jnp.float32)           # (K, Vt) f32
    beta = jnp.exp(logit - m_ref[...]) / s_ref[...]
    beta_ref[...] = beta.astype(beta_ref.dtype)


# ---------------------------------------------------------------------------
# Kernel 3: decode + recon.  grid = (nb, nv); res = theta @ beta_tile, fused
# log + masked-free per-row reduction, accumulated in the resident output block.
# ---------------------------------------------------------------------------
def etm_decode_kernel(theta_ref, beta_ref, bows_ref, recon_ref):
    @pl.when(pl.program_id(1) == 0)
    def _():
        recon_ref[...] = jnp.zeros_like(recon_ref)

    res = jnp.dot(theta_ref[...], beta_ref[...],
                  preferred_element_type=jnp.float32)             # (Bt, Vt) f32
    preds = jnp.log(res + 1e-6)
    recon_ref[...] += -jnp.sum(preds * bows_ref[...], axis=-1, keepdims=True)


# ---------------------------------------------------------------------------
# Wrapper
# ---------------------------------------------------------------------------
@functools.partial(jax.jit, static_argnames=("block_b", "block_v"))
def etm_forward(bows, nbows, params, *, block_b=256, block_v=512):
    wq, bq, wmu, bmu, wls, bls, rho_w, alphas_wT = params
    B, V = bows.shape
    H = wq.shape[1]
    K = wmu.shape[1]
    R = rho_w.shape[1]

    bt = min(block_b, B)
    vt = min(block_v, V)
    # TODO(synk): pad/mask ragged B/V; test shapes are chosen divisible.
    assert B % bt == 0 and V % vt == 0, "B and V must divide the tile sizes"
    nb, nv = B // bt, V // vt

    # Host-side (XLA) layout / dtype prep: bf16 for the V-scaled MXU operands,
    # fused [mu|logsigma] projection, lane-dense (K,R) x (R,V) beta operands.
    nbows_bf = nbows.astype(jnp.bfloat16)
    wq_bf = wq.astype(jnp.bfloat16)
    wml = jnp.concatenate([wmu, wls], axis=1)                    # (H, 2K) f32
    bml = jnp.concatenate([bmu, bls], axis=1)                    # (1, 2K) f32
    alphas_kr = alphas_wT.T.astype(jnp.bfloat16)                 # (K, R)
    rho_t = rho_w.T.astype(jnp.bfloat16)                         # (R, V)

    cp_bv = pltpu.CompilerParams(
        dimension_semantics=("parallel", "arbitrary"),
        vmem_limit_bytes=48 << 20)

    # ---- encoder ----------------------------------------------------------
    theta, kl_rows = pl.pallas_call(
        etm_encoder_kernel,
        out_shape=(jax.ShapeDtypeStruct((B, K), jnp.float32),
                   jax.ShapeDtypeStruct((B, 1), jnp.float32)),
        grid_spec=pltpu.PrefetchScalarGridSpec(
            num_scalar_prefetch=0,
            grid=(nb, nv),
            in_specs=[
                pl.BlockSpec((bt, vt), lambda b, v: (b, v)),      # nbows (bf16)
                pl.BlockSpec((vt, H), lambda b, v: (v, 0)),       # Wq (bf16)
                pl.BlockSpec((1, H), lambda b, v: (0, 0)),        # bq
                pl.BlockSpec((H, 2 * K), lambda b, v: (0, 0)),    # [Wmu|Wls]
                pl.BlockSpec((1, 2 * K), lambda b, v: (0, 0)),    # [bmu|bls]
            ],
            out_specs=(
                pl.BlockSpec((bt, K), lambda b, v: (b, 0)),       # theta
                pl.BlockSpec((bt, 1), lambda b, v: (b, 0)),       # per-row KL
            ),
            scratch_shapes=[pltpu.VMEM((bt, H), jnp.float32)],
        ),
        compiler_params=cp_bv,
    )(nbows_bf, wq_bf, bq, wml, bml)

    # ---- beta softmax stats (hoisted, batch-independent) -------------------
    m_k, s_k = pl.pallas_call(
        etm_beta_stats_kernel,
        out_shape=(jax.ShapeDtypeStruct((K, 1), jnp.float32),
                   jax.ShapeDtypeStruct((K, 1), jnp.float32)),
        grid_spec=pltpu.PrefetchScalarGridSpec(
            num_scalar_prefetch=0,
            grid=(nv,),
            in_specs=[
                pl.BlockSpec((K, R), lambda v: (0, 0)),
                pl.BlockSpec((R, vt), lambda v: (0, v)),
            ],
            out_specs=(
                pl.BlockSpec((K, 1), lambda v: (0, 0)),
                pl.BlockSpec((K, 1), lambda v: (0, 0)),
            ),
        ),
        compiler_params=pltpu.CompilerParams(
            dimension_semantics=("arbitrary",),
            vmem_limit_bytes=48 << 20),
    )(alphas_kr, rho_t)

    # ---- beta materialization (lane-dense (K, V), bf16) --------------------
    beta = pl.pallas_call(
        etm_beta_norm_kernel,
        out_shape=jax.ShapeDtypeStruct((K, V), jnp.bfloat16),
        grid_spec=pltpu.PrefetchScalarGridSpec(
            num_scalar_prefetch=0,
            grid=(nv,),
            in_specs=[
                pl.BlockSpec((K, R), lambda v: (0, 0)),
                pl.BlockSpec((R, vt), lambda v: (0, v)),
                pl.BlockSpec((K, 1), lambda v: (0, 0)),
                pl.BlockSpec((K, 1), lambda v: (0, 0)),
            ],
            out_specs=pl.BlockSpec((K, vt), lambda v: (0, v)),
        ),
        compiler_params=pltpu.CompilerParams(
            dimension_semantics=("parallel",),
            vmem_limit_bytes=48 << 20),
    )(alphas_kr, rho_t, m_k, s_k)

    # ---- decode + recon ----------------------------------------------------
    recon_rows = pl.pallas_call(
        etm_decode_kernel,
        out_shape=jax.ShapeDtypeStruct((B, 1), jnp.float32),
        grid_spec=pltpu.PrefetchScalarGridSpec(
            num_scalar_prefetch=0,
            grid=(nb, nv),
            in_specs=[
                pl.BlockSpec((bt, K), lambda b, v: (b, 0)),       # theta (bf16)
                pl.BlockSpec((K, vt), lambda b, v: (0, v)),       # beta (bf16)
                pl.BlockSpec((bt, vt), lambda b, v: (b, v)),      # bows (f32)
            ],
            out_specs=pl.BlockSpec((bt, 1), lambda b, v: (b, 0)),
        ),
        compiler_params=cp_bv,
    )(theta.astype(jnp.bfloat16), beta, bows)

    recon = jnp.mean(recon_rows)   # aggregate=True
    kl = jnp.mean(kl_rows)
    return recon, kl


# ---------------------------------------------------------------------------
# Pure-JAX f32 reference mirroring the PyTorch forward (eval mode).
# ---------------------------------------------------------------------------
def etm_reference(bows, nbows, params):
    wq, bq, wmu, bmu, wls, bls, rho_w, alphas_wT = params
    h = jnp.maximum(nbows @ wq + bq, 0.0)
    mu = h @ wmu + bmu
    logsigma = h @ wls + bls
    kl = (-0.5 * jnp.sum(1.0 + logsigma - mu**2 - jnp.exp(logsigma), axis=-1)).mean()
    theta = jax.nn.softmax(mu, axis=-1)
    logit = rho_w @ alphas_wT                    # (V, K)
    beta = jax.nn.softmax(logit, axis=0).T       # (K, V)
    res = theta @ beta
    preds = jnp.log(res + 1e-6)
    recon = (-(preds * bows).sum(axis=1)).mean()
    return recon, kl


def _linear_init(key, fan_in, fan_out, with_bias):
    """PyTorch nn.Linear default init: U(-1/sqrt(fan_in), 1/sqrt(fan_in))."""
    kw, kb = jax.random.split(key)
    bound = 1.0 / jnp.sqrt(fan_in)
    w = jax.random.uniform(kw, (fan_in, fan_out), jnp.float32, -bound, bound)
    b = (jax.random.uniform(kb, (1, fan_out), jnp.float32, -bound, bound)
         if with_bias else None)
    return w, b


if __name__ == "__main__":
    # Small, tile-friendly shapes consistent with the module
    # (batch, vocab, t_hidden, rho_size, num_topics).
    B, V, H, R, K = 32, 512, 128, 128, 16

    key = jax.random.PRNGKey(0)
    k_bow, k_q, k_mu, k_ls, k_rho, k_alpha = jax.random.split(key, 6)

    # Parameters (deterministic, PyTorch-style init), pre-transposed (in, out).
    wq, bq = _linear_init(k_q, V, H, True)            # q_theta: Linear(V, H)
    wmu, bmu = _linear_init(k_mu, H, K, True)         # mu_q_theta
    wls, bls = _linear_init(k_ls, H, K, True)         # logsigma_q_theta
    rho_w, _ = _linear_init(k_rho, V, R, False)       # rho.weight   -> (V, R)
    alphas_w, _ = _linear_init(k_alpha, R, K, False)  # alphas.weight^T -> (R, K)
    params = (wq, bq, wmu, bmu, wls, bls, rho_w, alphas_w)

    # Inputs: bag-of-words counts and row-normalized bows.
    bows = jax.random.uniform(k_bow, (B, V), jnp.float32, 0.0, 5.0)
    nbows = bows / jnp.sum(bows, axis=1, keepdims=True)

    # 2 batch tiles x 2 vocab tiles to exercise the grid / accumulators.
    recon, kl = jax.block_until_ready(
        etm_forward(bows, nbows, params, block_b=16, block_v=256))
    recon_ref, kl_ref = etm_reference(bows, nbows, params)

    # bf16 MXU inputs -> slightly looser tolerance than pure-f32.
    assert jnp.allclose(recon, recon_ref, rtol=2e-2, atol=2e-2), (recon, recon_ref)
    assert jnp.allclose(kl, kl_ref, rtol=2e-2, atol=2e-2), (kl, kl_ref)
    print("KERNEL_OK")
</pallas_src>

<mosaic_0001>
module attributes {stable_mosaic.version = 11 : i64} {
  func.func @etm_beta_norm_kernel(%arg0: i32, %arg1: memref<16x128xbf16, #tpu.memory_space<vmem>>, %arg2: memref<128x256xbf16, #tpu.memory_space<vmem>>, %arg3: memref<16x1xf32, #tpu.memory_space<vmem>>, %arg4: memref<16x1xf32, #tpu.memory_space<vmem>>, %arg5: memref<16x256xbf16, #tpu.memory_space<vmem>>) attributes {dimension_semantics = [#tpu.dimension_semantics<parallel>], iteration_bounds = array<i64: 2>, scalar_prefetch = 0 : i64, scratch_operands = 0 : i64, tpu.core_type = #tpu.core_type<tc>, window_params = [{pipeline_mode = #tpu.pipeline_mode<synchronous>, transform_indices = @transform_0, window_bounds = array<i64: 16, 128>}, {transform_indices = @transform_1, window_bounds = array<i64: 128, 256>}, {pipeline_mode = #tpu.pipeline_mode<synchronous>, transform_indices = @transform_2, window_bounds = array<i64: 16, 1>}, {pipeline_mode = #tpu.pipeline_mode<synchronous>, transform_indices = @transform_3, window_bounds = array<i64: 16, 1>}, {transform_indices = @transform_4, window_bounds = array<i64: 16, 256>}]} {
    %c0 = arith.constant 0 : index
    %c0_0 = arith.constant 0 : index
    %0 = vector.load %arg1[%c0, %c0_0] : memref<16x128xbf16, #tpu.memory_space<vmem>>, vector<16x128xbf16>
    %c0_1 = arith.constant 0 : index
    %c0_2 = arith.constant 0 : index
    %1 = vector.load %arg2[%c0_1, %c0_2] : memref<128x256xbf16, #tpu.memory_space<vmem>>, vector<128x256xbf16>
    %cst = arith.constant dense<0.000000e+00> : vector<16x256xf32>
    %2 = tpu.matmul %0, %1, %cst {dimension_numbers = #tpu.dot_dimension_numbers<[1], [0], [0], [1], [0, 0, 1, 1], [], []>} : vector<16x128xbf16>, vector<128x256xbf16>, vector<16x256xf32> -> vector<16x256xf32>
    %c0_3 = arith.constant 0 : index
    %c0_4 = arith.constant 0 : index
    %3 = vector.load %arg3[%c0_3, %c0_4] : memref<16x1xf32, #tpu.memory_space<vmem>>, vector<16x1xf32>
    %4 = vector.broadcast %3 : vector<16x1xf32> to vector<16x256xf32>
    %5 = arith.subf %2, %4 : vector<16x256xf32>
    %6 = math.exp %5 : vector<16x256xf32>
    %c0_5 = arith.constant 0 : index
    %c0_6 = arith.constant 0 : index
    %7 = vector.load %arg4[%c0_5, %c0_6] : memref<16x1xf32, #tpu.memory_space<vmem>>, vector<16x1xf32>
    %8 = vector.broadcast %7 : vector<16x1xf32> to vector<16x256xf32>
    %9 = arith.divf %6, %8 : vector<16x256xf32>
    %10 = arith.truncf %9 : vector<16x256xf32> to vector<16x256xbf16>
    %c0_7 = arith.constant 0 : index
    %c0_8 = arith.constant 0 : index
    %11 = vector.load %arg5[%c0_7, %c0_8] : memref<16x256xbf16, #tpu.memory_space<vmem>>, vector<16x256xbf16>
    tpu.vector_store %arg5[%c0_7, %c0_8], %10 {strides = array<i32>} : memref<16x256xbf16, #tpu.memory_space<vmem>>, vector<16x256xbf16>,
    return
  }
  func.func @transform_0(%arg0: i32) -> (i32, i32) {
    %c0_i32 = arith.constant 0 : i32
    %c0_i32_0 = arith.constant 0 : i32
    %c0_i32_1 = arith.constant 0 : i32
    return %c0_i32, %c0_i32_0 : i32, i32
  }
  func.func @transform_1(%arg0: i32) -> (i32, i32) {
    %c0_i32 = arith.constant 0 : i32
    %c0_i32_0 = arith.constant 0 : i32
    return %c0_i32, %arg0 : i32, i32
  }
  func.func @transform_2(%arg0: i32) -> (i32, i32) {
    %c0_i32 = arith.constant 0 : i32
    %c0_i32_0 = arith.constant 0 : i32
    %c0_i32_1 = arith.constant 0 : i32
    return %c0_i32, %c0_i32_0 : i32, i32
  }
  func.func @transform_3(%arg0: i32) -> (i32, i32) {
    %c0_i32 = arith.constant 0 : i32
    %c0_i32_0 = arith.constant 0 : i32
    %c0_i32_1 = arith.constant 0 : i32
    return %c0_i32, %c0_i32_0 : i32, i32
  }
  func.func @transform_4(%arg0: i32) -> (i32, i32) {
    %c0_i32 = arith.constant 0 : i32
    %c0_i32_0 = arith.constant 0 : i32
    return %c0_i32, %arg0 : i32, i32
  }
}

module attributes {stable_mosaic.version = 11 : i64} {
  func.func @etm_beta_stats_kernel(%arg0: i32, %arg1: memref<16x128xbf16, #tpu.memory_space<vmem>>, %arg2: memref<128x256xbf16, #tpu.memory_space<vmem>>, %arg3: memref<16x1xf32, #tpu.memory_space<vmem>>, %arg4: memref<16x1xf32, #tpu.memory_space<vmem>>) attributes {dimension_semantics = [#tpu.dimension_semantics<arbitrary>], iteration_bounds = array<i64: 2>, scalar_prefetch = 0 : i64, scratch_operands = 0 : i64, tpu.core_type = #tpu.core_type<tc>, window_params = [{pipeline_mode = #tpu.pipeline_mode<synchronous>, transform_indices = @transform_0, window_bounds = array<i64: 16, 128>}, {transform_indices = @transform_1, window_bounds = array<i64: 128, 256>}, {pipeline_mode = #tpu.pipeline_mode<synchronous>, transform_indices = @transform_2, window_bounds = array<i64: 16, 1>}, {pipeline_mode = #tpu.pipeline_mode<synchronous>, transform_indices = @transform_3, window_bounds = array<i64: 16, 1>}]} {
    %c0_i32 = arith.constant 0 : i32
    %0 = arith.cmpi eq, %arg0, %c0_i32 : i32
    %1 = arith.extui %0 : i1 to i32
    %c0_i32_0 = arith.constant 0 : i32
    %2 = arith.cmpi ne, %1, %c0_i32_0 : i32
    scf.if %2 {
      %cst_14 = arith.constant 0xFF800000 : f32
      %22 = vector.broadcast %cst_14 : f32 to vector<16x1xf32>
      %c0_15 = arith.constant 0 : index
      %c0_16 = arith.constant 0 : index
      %23 = vector.load %arg3[%c0_15, %c0_16] : memref<16x1xf32, #tpu.memory_space<vmem>>, vector<16x1xf32>
      tpu.vector_store %arg3[%c0_15, %c0_16], %22 {strides = array<i32>} : memref<16x1xf32, #tpu.memory_space<vmem>>, vector<16x1xf32>,
      %cst_17 = arith.constant 0.000000e+00 : f32
      %24 = vector.broadcast %cst_17 : f32 to vector<16x1xf32>
      %c0_18 = arith.constant 0 : index
      %c0_19 = arith.constant 0 : index
      %25 = vector.load %arg4[%c0_18, %c0_19] : memref<16x1xf32, #tpu.memory_space<vmem>>, vector<16x1xf32>
      tpu.vector_store %arg4[%c0_18, %c0_19], %24 {strides = array<i32>} : memref<16x1xf32, #tpu.memory_space<vmem>>, vector<16x1xf32>,
    } else {
    }
    %c0 = arith.constant 0 : index
    %c0_1 = arith.constant 0 : index
    %3 = vector.load %arg1[%c0, %c0_1] : memref<16x128xbf16, #tpu.memory_space<vmem>>, vector<16x128xbf16>
    %c0_2 = arith.constant 0 : index
    %c0_3 = arith.constant 0 : index
    %4 = vector.load %arg2[%c0_2, %c0_3] : memref<128x256xbf16, #tpu.memory_space<vmem>>, vector<128x256xbf16>
    %cst = arith.constant dense<0.000000e+00> : vector<16x256xf32>
    %5 = tpu.matmul %3, %4, %cst {dimension_numbers = #tpu.dot_dimension_numbers<[1], [0], [0], [1], [0, 0, 1, 1], [], []>} : vector<16x128xbf16>, vector<128x256xbf16>, vector<16x256xf32> -> vector<16x256xf32>
    %c0_4 = arith.constant 0 : index
    %c0_5 = arith.constant 0 : index
    %6 = vector.load %arg3[%c0_4, %c0_5] : memref<16x1xf32, #tpu.memory_space<vmem>>, vector<16x1xf32>
    %cst_6 = arith.constant dense<0xFF800000> : vector<16xf32>
    %7 = vector.multi_reduction <maximumf>, %5, %cst_6 [1] : vector<16x256xf32> to vector<16xf32>
    %8 = vector.shape_cast %7 : vector<16xf32> to vector<16x1xf32>
    %9 = arith.maximumf %6, %8 : vector<16x1xf32>
    %c0_7 = arith.constant 0 : index
    %c0_8 = arith.constant 0 : index
    %10 = vector.load %arg4[%c0_7, %c0_8] : memref<16x1xf32, #tpu.memory_space<vmem>>, vector<16x1xf32>
    %11 = arith.subf %6, %9 : vector<16x1xf32>
    %12 = math.exp %11 : vector<16x1xf32>
    %13 = arith.mulf %10, %12 : vector<16x1xf32>
    %14 = vector.broadcast %9 : vector<16x1xf32> to vector<16x256xf32>
    %15 = arith.subf %5, %14 : vector<16x256xf32>
    %16 = math.exp %15 : vector<16x256xf32>
    %cst_9 = arith.constant dense<0.000000e+00> : vector<16xf32>
    %17 = vector.multi_reduction <add>, %16, %cst_9 [1] : vector<16x256xf32> to vector<16xf32>
    %18 = vector.shape_cast %17 : vector<16xf32> to vector<16x1xf32>
    %19 = arith.addf %13, %18 : vector<16x1xf32>
    %c0_10 = arith.constant 0 : index
    %c0_11 = arith.constant 0 : index
    %20 = vector.load %arg4[%c0_10, %c0_11] : memref<16x1xf32, #tpu.memory_space<vmem>>, vector<16x1xf32>
    tpu.vector_store %arg4[%c0_10, %c0_11], %19 {strides = array<i32>} : memref<16x1xf32, #tpu.memory_space<vmem>>, vector<16x1xf32>,
    %c0_12 = arith.constant 0 : index
    %c0_13 = arith.constant 0 : index
    %21 = vector.load %arg3[%c0_12, %c0_13] : memref<16x1xf32, #tpu.memory_space<vmem>>, vector<16x1xf32>
    tpu.vector_store %arg3[%c0_12, %c0_13], %9 {strides = array<i32>} : memref<16x1xf32, #tpu.memory_space<vmem>>, vector<16x1xf32>,
    return
  }
  func.func @transform_0(%arg0: i32) -> (i32, i32) {
    %c0_i32 = arith.constant 0 : i32
    %c0_i32_0 = arith.constant 0 : i32
    %c0_i32_1 = arith.constant 0 : i32
    return %c0_i32, %c0_i32_0 : i32, i32
  }
  func.func @transform_1(%arg0: i32) -> (i32, i32) {
    %c0_i32 = arith.constant 0 : i32
    %c0_i32_0 = arith.constant 0 : i32
    return %c0_i32, %arg0 : i32, i32
  }
  func.func @transform_2(%arg0: i32) -> (i32, i32) {
    %c0_i32 = arith.constant 0 : i32
    %c0_i32_0 = arith.constant 0 : i32
    %c0_i32_1 = arith.constant 0 : i32
    return %c0_i32, %c0_i32_0 : i32, i32
  }
  func.func @transform_3(%arg0: i32) -> (i32, i32) {
    %c0_i32 = arith.constant 0 : i32
    %c0_i32_0 = arith.constant 0 : i32
    %c0_i32_1 = arith.constant 0 : i32
    return %c0_i32, %c0_i32_0 : i32, i32
  }
}

module attributes {stable_mosaic.version = 11 : i64} {
  func.func @etm_encoder_kernel(%arg0: i32, %arg1: i32, %arg2: memref<16x256xbf16, #tpu.memory_space<vmem>>, %arg3: memref<256x128xbf16, #tpu.memory_space<vmem>>, %arg4: memref<1x128xf32, #tpu.memory_space<vmem>>, %arg5: memref<128x32xf32, #tpu.memory_space<vmem>>, %arg6: memref<1x32xf32, #tpu.memory_space<vmem>>, %arg7: memref<16x16xf32, #tpu.memory_space<vmem>>, %arg8: memref<16x1xf32, #tpu.memory_space<vmem>>, %arg9: memref<16x128xf32, #tpu.memory_space<vmem>>) attributes {dimension_semantics = [#tpu.dimension_semantics<parallel>, #tpu.dimension_semantics<arbitrary>], iteration_bounds = array<i64: 2, 2>, scalar_prefetch = 0 : i64, scratch_operands = 1 : i64, tpu.core_type = #tpu.core_type<tc>, window_params = [{transform_indices = @transform_0, window_bounds = array<i64: 16, 256>}, {transform_indices = @transform_1, window_bounds = array<i64: 256, 128>}, {pipeline_mode = #tpu.pipeline_mode<synchronous>, transform_indices = @transform_2, window_bounds = array<i64: 1, 128>}, {pipeline_mode = #tpu.pipeline_mode<synchronous>, transform_indices = @transform_3, window_bounds = array<i64: 128, 32>}, {pipeline_mode = #tpu.pipeline_mode<synchronous>, transform_indices = @transform_4, window_bounds = array<i64: 1, 32>}, {transform_indices = @transform_5, window_bounds = array<i64: 16, 16>}, {transform_indices = @transform_6, window_bounds = array<i64: 16, 1>}]} {
    %c0_i32 = arith.constant 0 : i32
    %0 = arith.cmpi eq, %arg1, %c0_i32 : i32
    %1 = arith.extui %0 : i1 to i32
    %c0_i32_0 = arith.constant 0 : i32
    %2 = arith.cmpi ne, %1, %c0_i32_0 : i32
    scf.if %2 {
      %cst_9 = arith.constant 0.000000e+00 : f32
      %12 = vector.broadcast %cst_9 : f32 to vector<16x128xf32>
      %c0_10 = arith.constant 0 : index
      %c0_11 = arith.constant 0 : index
      %13 = vector.load %arg9[%c0_10, %c0_11] : memref<16x128xf32, #tpu.memory_space<vmem>>, vector<16x128xf32>
      tpu.vector_store %arg9[%c0_10, %c0_11], %12 {strides = array<i32>} : memref<16x128xf32, #tpu.memory_space<vmem>>, vector<16x128xf32>,
    } else {
    }
    %c0 = arith.constant 0 : index
    %c0_1 = arith.constant 0 : index
    %3 = vector.load %arg9[%c0, %c0_1] : memref<16x128xf32, #tpu.memory_space<vmem>>, vector<16x128xf32>
    %c0_2 = arith.constant 0 : index
    %c0_3 = arith.constant 0 : index
    %4 = vector.load %arg2[%c0_2, %c0_3] : memref<16x256xbf16, #tpu.memory_space<vmem>>, vector<16x256xbf16>
    %c0_4 = arith.constant 0 : index
    %c0_5 = arith.constant 0 : index
    %5 = vector.load %arg3[%c0_4, %c0_5] : memref<256x128xbf16, #tpu.memory_space<vmem>>, vector<256x128xbf16>
    %cst = arith.constant dense<0.000000e+00> : vector<16x128xf32>
    %6 = tpu.matmul %4, %5, %cst {dimension_numbers = #tpu.dot_dimension_numbers<[1], [0], [0], [1], [0, 0, 1, 1], [], []>} : vector<16x256xbf16>, vector<256x128xbf16>, vector<16x128xf32> -> vector<16x128xf32>
    %7 = arith.addf %3, %6 : vector<16x128xf32>
    %c0_6 = arith.constant 0 : index
    %c0_7 = arith.constant 0 : index
    %8 = vector.load %arg9[%c0_6, %c0_7] : memref<16x128xf32, #tpu.memory_space<vmem>>, vector<16x128xf32>
    tpu.vector_store %arg9[%c0_6, %c0_7], %7 {strides = array<i32>} : memref<16x128xf32, #tpu.memory_space<vmem>>, vector<16x128xf32>,
    %c1_i32 = arith.constant 1 : i32
    %9 = arith.cmpi eq, %arg1, %c1_i32 : i32
    %10 = arith.extui %9 : i1 to i32
    %c0_i32_8 = arith.constant 0 : i32
    %11 = arith.cmpi ne, %10, %c0_i32_8 : i32
    scf.if %11 {
      %c0_9 = arith.constant 0 : index
      %c0_10 = arith.constant 0 : index
      %12 = vector.load %arg9[%c0_9, %c0_10] : memref<16x128xf32, #tpu.memory_space<vmem>>, vector<16x128xf32>
      %c0_11 = arith.constant 0 : index
      %c0_12 = arith.constant 0 : index
      %13 = vector.load %arg4[%c0_11, %c0_12] : memref<1x128xf32, #tpu.memory_space<vmem>>, vector<1x128xf32>
      %14 = vector.broadcast %13 : vector<1x128xf32> to vector<16x128xf32>
      %15 = arith.addf %12, %14 : vector<16x128xf32>
      %cst_13 = arith.constant 0.000000e+00 : f32
      %16 = vector.broadcast %cst_13 : f32 to vector<16x128xf32>
      %17 = arith.maximumf %15, %16 : vector<16x128xf32>
      %c0_14 = arith.constant 0 : index
      %c0_15 = arith.constant 0 : index
      %18 = vector.load %arg5[%c0_14, %c0_15] : memref<128x32xf32, #tpu.memory_space<vmem>>, vector<128x32xf32>
      %cst_16 = arith.constant dense<0.000000e+00> : vector<16x32xf32>
      %19 = tpu.matmul %17, %18, %cst_16 {dimension_numbers = #tpu.dot_dimension_numbers<[1], [0], [0], [1], [0, 0, 1, 1], [], []>} : vector<16x128xf32>, vector<128x32xf32>, vector<16x32xf32> -> vector<16x32xf32>
      %c0_17 = arith.constant 0 : index
      %c0_18 = arith.constant 0 : index
      %20 = vector.load %arg6[%c0_17, %c0_18] : memref<1x32xf32, #tpu.memory_space<vmem>>, vector<1x32xf32>
      %21 = vector.broadcast %20 : vector<1x32xf32> to vector<16x32xf32>
      %22 = arith.addf %19, %21 : vector<16x32xf32>
      %23 = vector.extract_strided_slice %22 {offsets = [0, 0], sizes = [16, 16], strides = [1, 1]} : vector<16x32xf32> to vector<16x16xf32>
      %24 = vector.extract_strided_slice %22 {offsets = [0, 16], sizes = [16, 16], strides = [1, 1]} : vector<16x32xf32> to vector<16x16xf32>
      %cst_19 = arith.constant 1.000000e+00 : f32
      %25 = vector.broadcast %cst_19 : f32 to vector<16x16xf32>
      %26 = arith.addf %25, %24 : vector<16x16xf32>
      %27 = arith.mulf %23, %23 : vector<16x16xf32>
      %28 = arith.subf %26, %27 : vector<16x16xf32>
      %29 = math.exp %24 : vector<16x16xf32>
      %30 = arith.subf %28, %29 : vector<16x16xf32>
      %cst_20 = arith.constant dense<0.000000e+00> : vector<16xf32>
      %31 = vector.multi_reduction <add>, %30, %cst_20 [1] : vector<16x16xf32> to vector<16xf32>
      %32 = vector.shape_cast %31 : vector<16xf32> to vector<16x1xf32>
      %cst_21 = arith.constant -5.000000e-01 : f32
      %33 = vector.broadcast %cst_21 : f32 to vector<16x1xf32>
      %34 = arith.mulf %33, %32 : vector<16x1xf32>
      %c0_22 = arith.constant 0 : index
      %c0_23 = arith.constant 0 : index
      %35 = vector.load %arg8[%c0_22, %c0_23] : memref<16x1xf32, #tpu.memory_space<vmem>>, vector<16x1xf32>
      tpu.vector_store %arg8[%c0_22, %c0_23], %34 {strides = array<i32>} : memref<16x1xf32, #tpu.memory_space<vmem>>, vector<16x1xf32>,
      %cst_24 = arith.constant dense<0xFF800000> : vector<16xf32>
      %36 = vector.multi_reduction <maximumf>, %23, %cst_24 [1] : vector<16x16xf32> to vector<16xf32>
      %37 = vector.shape_cast %36 : vector<16xf32> to vector<16x1xf32>
      %38 = vector.broadcast %37 : vector<16x1xf32> to vector<16x16xf32>
      %39 = arith.subf %23, %38 : vector<16x16xf32>
      %40 = math.exp %39 : vector<16x16xf32>
      %cst_25 = arith.constant dense<0.000000e+00> : vector<16xf32>
      %41 = vector.multi_reduction <add>, %40, %cst_25 [1] : vector<16x16xf32> to vector<16xf32>
      %42 = vector.shape_cast %41 : vector<16xf32> to vector<16x1xf32>
      %43 = vector.broadcast %42 : vector<16x1xf32> to vector<16x16xf32>
      %44 = arith.divf %40, %43 : vector<16x16xf32>
      %c0_26 = arith.constant 0 : index
      %c0_27 = arith.constant 0 : index
      %45 = vector.load %arg7[%c0_26, %c0_27] : memref<16x16xf32, #tpu.memory_space<vmem>>, vector<16x16xf32>
      tpu.vector_store %arg7[%c0_26, %c0_27], %44 {strides = array<i32>} : memref<16x16xf32, #tpu.memory_space<vmem>>, vector<16x16xf32>,
    } else {
    }
    return
  }
  func.func @transform_0(%arg0: i32, %arg1: i32) -> (i32, i32) {
    %c0_i32 = arith.constant 0 : i32
    return %arg0, %arg1 : i32, i32
  }
  func.func @transform_1(%arg0: i32, %arg1: i32) -> (i32, i32) {
    %c0_i32 = arith.constant 0 : i32
    %c0_i32_0 = arith.constant 0 : i32
    return %arg1, %c0_i32 : i32, i32
  }
  func.func @transform_2(%arg0: i32, %arg1: i32) -> (i32, i32) {
    %c0_i32 = arith.constant 0 : i32
    %c0_i32_0 = arith.constant 0 : i32
    %c0_i32_1 = arith.constant 0 : i32
    return %c0_i32, %c0_i32_0 : i32, i32
  }
  func.func @transform_3(%arg0: i32, %arg1: i32) -> (i32, i32) {
    %c0_i32 = arith.constant 0 : i32
    %c0_i32_0 = arith.constant 0 : i32
    %c0_i32_1 = arith.constant 0 : i32
    return %c0_i32, %c0_i32_0 : i32, i32
  }
  func.func @transform_4(%arg0: i32, %arg1: i32) -> (i32, i32) {
    %c0_i32 = arith.constant 0 : i32
    %c0_i32_0 = arith.constant 0 : i32
    %c0_i32_1 = arith.constant 0 : i32
    return %c0_i32, %c0_i32_0 : i32, i32
  }
  func.func @transform_5(%arg0: i32, %arg1: i32) -> (i32, i32) {
    %c0_i32 = arith.constant 0 : i32
    %c0_i32_0 = arith.constant 0 : i32
    return %arg0, %c0_i32 : i32, i32
  }
  func.func @transform_6(%arg0: i32, %arg1: i32) -> (i32, i32) {
    %c0_i32 = arith.constant 0 : i32
    %c0_i32_0 = arith.constant 0 : i32
    return %arg0, %c0_i32 : i32, i32
  }
}

module attributes {stable_mosaic.version = 11 : i64} {
  func.func @etm_decode_kernel(%arg0: i32, %arg1: i32, %arg2: memref<16x16xbf16, #tpu.memory_space<vmem>>, %arg3: memref<16x256xbf16, #tpu.memory_space<vmem>>, %arg4: memref<16x256xf32, #tpu.memory_space<vmem>>, %arg5: memref<16x1xf32, #tpu.memory_space<vmem>>) attributes {dimension_semantics = [#tpu.dimension_semantics<parallel>, #tpu.dimension_semantics<arbitrary>], iteration_bounds = array<i64: 2, 2>, scalar_prefetch = 0 : i64, scratch_operands = 0 : i64, tpu.core_type = #tpu.core_type<tc>, window_params = [{transform_indices = @transform_0, window_bounds = array<i64: 16, 16>}, {transform_indices = @transform_1, window_bounds = array<i64: 16, 256>}, {transform_indices = @transform_2, window_bounds = array<i64: 16, 256>}, {transform_indices = @transform_3, window_bounds = array<i64: 16, 1>}]} {
    %c0_i32 = arith.constant 0 : i32
    %0 = arith.cmpi eq, %arg1, %c0_i32 : i32
    %1 = arith.extui %0 : i1 to i32
    %c0_i32_0 = arith.constant 0 : i32
    %2 = arith.cmpi ne, %1, %c0_i32_0 : i32
    scf.if %2 {
      %cst_13 = arith.constant 0.000000e+00 : f32
      %18 = vector.broadcast %cst_13 : f32 to vector<16x1xf32>
      %c0_14 = arith.constant 0 : index
      %c0_15 = arith.constant 0 : index
      %19 = vector.load %arg5[%c0_14, %c0_15] : memref<16x1xf32, #tpu.memory_space<vmem>>, vector<16x1xf32>
      tpu.vector_store %arg5[%c0_14, %c0_15], %18 {strides = array<i32>} : memref<16x1xf32, #tpu.memory_space<vmem>>, vector<16x1xf32>,
    } else {
    }
    %c0 = arith.constant 0 : index
    %c0_1 = arith.constant 0 : index
    %3 = vector.load %arg2[%c0, %c0_1] : memref<16x16xbf16, #tpu.memory_space<vmem>>, vector<16x16xbf16>
    %c0_2 = arith.constant 0 : index
    %c0_3 = arith.constant 0 : index
    %4 = vector.load %arg3[%c0_2, %c0_3] : memref<16x256xbf16, #tpu.memory_space<vmem>>, vector<16x256xbf16>
    %cst = arith.constant dense<0.000000e+00> : vector<16x256xf32>
    %5 = tpu.matmul %3, %4, %cst {dimension_numbers = #tpu.dot_dimension_numbers<[1], [0], [0], [1], [0, 0, 1, 1], [], []>} : vector<16x16xbf16>, vector<16x256xbf16>, vector<16x256xf32> -> vector<16x256xf32>
    %cst_4 = arith.constant 9.99999997E-7 : f32
    %6 = vector.broadcast %cst_4 : f32 to vector<16x256xf32>
    %7 = arith.addf %5, %6 : vector<16x256xf32>
    %8 = math.log %7 : vector<16x256xf32>
    %c0_5 = arith.constant 0 : index
    %c0_6 = arith.constant 0 : index
    %9 = vector.load %arg5[%c0_5, %c0_6] : memref<16x1xf32, #tpu.memory_space<vmem>>, vector<16x1xf32>
    %c0_7 = arith.constant 0 : index
    %c0_8 = arith.constant 0 : index
    %10 = vector.load %arg4[%c0_7, %c0_8] : memref<16x256xf32, #tpu.memory_space<vmem>>, vector<16x256xf32>
    %11 = arith.mulf %8, %10 : vector<16x256xf32>
    %cst_9 = arith.constant dense<0.000000e+00> : vector<16xf32>
    %12 = vector.multi_reduction <add>, %11, %cst_9 [1] : vector<16x256xf32> to vector<16xf32>
    %13 = vector.shape_cast %12 : vector<16xf32> to vector<16x1xf32>
    %cst_10 = arith.constant 0.000000e+00 : f32
    %14 = vector.broadcast %cst_10 : f32 to vector<16x1xf32>
    %15 = arith.subf %14, %13 : vector<16x1xf32>
    %16 = arith.addf %9, %15 : vector<16x1xf32>
    %c0_11 = arith.constant 0 : index
    %c0_12 = arith.constant 0 : index
    %17 = vector.load %arg5[%c0_11, %c0_12] : memref<16x1xf32, #tpu.memory_space<vmem>>, vector<16x1xf32>
    tpu.vector_store %arg5[%c0_11, %c0_12], %16 {strides = array<i32>} : memref<16x1xf32, #tpu.memory_space<vmem>>, vector<16x1xf32>,
    return
  }
  func.func @transform_0(%arg0: i32, %arg1: i32) -> (i32, i32) {
    %c0_i32 = arith.constant 0 : i32
    %c0_i32_0 = arith.constant 0 : i32
    return %arg0, %c0_i32 : i32, i32
  }
  func.func @transform_1(%arg0: i32, %arg1: i32) -> (i32, i32) {
    %c0_i32 = arith.constant 0 : i32
    %c0_i32_0 = arith.constant 0 : i32
    return %c0_i32, %arg1 : i32, i32
  }
  func.func @transform_2(%arg0: i32, %arg1: i32) -> (i32, i32) {
    %c0_i32 = arith.constant 0 : i32
    return %arg0, %arg1 : i32, i32
  }
  func.func @transform_3(%arg0: i32, %arg1: i32) -> (i32, i32) {
    %c0_i32 = arith.constant 0 : i32
    %c0_i32_0 = arith.constant 0 : i32
    return %arg0, %c0_i32 : i32, i32
  }
}

</mosaic_0001>

<llo_original>
// kernel: etm_forward.6
$region0: #{etm_forward.6}
  #allocation0 [shape = 'u32[]', space=smem, size = 0x4, offset = 0x4, fixed_abs, tag = 'smem constant byte address 0x4 - core index']
  #allocation1 [shape = 'u32[144,128]{1,0:T(1,128)}', space=vmem, size = 0x12000, scoped, tag = 'internal scratch']
  %s0 = inlined_call_operand.vmem [shape: bf16[16,128], index: 0, kind: input, shape index: {}]
  %s1 = inlined_call_operand.vmem [shape: bf16[128,512], index: 1, kind: input, shape index: {}]
  %s2 = inlined_call_operand.vmem [shape: f32[16,1], index: 2, kind: input, shape index: {}]
  %s3 = inlined_call_operand.vmem [shape: f32[16,1], index: 3, kind: input, shape index: {}]
  %s4 = inlined_call_operand.vmem [shape: bf16[16,512], index: 4, kind: output, shape index: {}]
  %s5 = sld [smem:[#allocation0]]
  $region121: #{etm_forward.6} parent=0
    _
  %s7 = ssub.s32 1, %s5
  %s8 = scalar_select 0, %s7, %s5
  $region1: #{etm_forward.6} parent=0
    #allocation2 [shape = 'u8[131072]{0}', space=vmem, size = 0x20000, scoped, tag = 'input window, operand 1']
    #allocation3 [shape = 'u8[16384]{0}', space=vmem, size = 0x4000, scoped, tag = 'output window, operand 0']
    loop: start=0, step=1, limit=4
    $region2: #{etm_forward.6} parent=1 // loop_pre_header
      _
    $region3: #{etm_forward.6} parent=1 // loop_header
      %s10 = sphi 0, %s14
      %p11 = scmp.ge.s32.totalorder %s10, 4
      %s18 = sphi 0, %s18
      %s20 = sphi 0, %s18
      %s21 = sphi 0, %s20
      %s35 = sphi 0, %s21
      %s41 = sphi 0, %s43
      %s44 = sphi 0, %s41
      %s45 = sphi 0, %s44
      %s61 = sphi 0, %s45
      %s65 = sphi 0, %s65
      %s67 = sphi 0, %s65
      %s68 = sphi 0, %s67
      %s82 = sphi 0, %s68
      %s86 = sphi 0, %s86
      %s88 = sphi 0, %s86
      %s89 = sphi 0, %s88
      %s103 = sphi 0, %s89
      %s109 = sphi 0, %s111
      %s112 = sphi 0, %s109
      %s113 = sphi 0, %s112
      %s129 = sphi 0, %s113
    $region4: #{etm_forward.6} parent=1 // loop_header_branch
      %13 = sbr.rel (%p11) target = $region8
    $region5: #{etm_forward.6} parent=1 // loop_body
      %s15 = ssub.s32 %s10, 1
      %s16 = ssub.s32 %s10, 2
      %s17 = sadd.s32 %s10, 1
      %s19 = sadd.s32 %s18, 1
      %p22 = scmp.eq.s32.totalorder %s10, 1
      %p23 = scmp.ne.s32.totalorder %s18, %s20
      %p24 = scmp.eq.s32.totalorder %s10, 0
      %p25 = por %p23, %p24
      %p26 = scmp.ne.s32.totalorder %s18, %s20
      %p27 = scmp.eq.s32.totalorder %s15, 1
      %p28 = por %p26, %p27
      %p29 = scmp.ne.s32.totalorder %s20, %s21
      %p30 = scmp.eq.s32.totalorder %s15, 0
      %p31 = por %p29, %p30
      %p32 = scmp.ne.s32.totalorder %s20, %s21
      %p33 = scmp.eq.s32.totalorder %s16, 1
      %p34 = por %p32, %p33
      %p36 = scmp.ne.s32.totalorder %s21, %s35
      %p37 = scmp.eq.s32.totalorder %s16, 0
      %p38 = por %p36, %p37
      %s39 = ssub.s32 %s10, %s17
      %p40 = scmp.eq.s32.totalorder %s39, 0
      %s42 = sadd.s32 %s41, 1
      %s43 = scalar_select %p40, %s41, %s42
      %p46 = pneg %p40
      %p47 = scmp.eq.s32.totalorder %s10, 1
      %p48 = por %p46, %p47
      %p49 = scmp.ne.s32.totalorder %s41, %s44
      %p50 = scmp.eq.s32.totalorder %s10, 0
      %p51 = por %p49, %p50
      %p52 = scmp.ne.s32.totalorder %s41, %s44
      %p53 = scmp.eq.s32.totalorder %s15, 1
      %p54 = por %p52, %p53
      %p55 = scmp.ne.s32.totalorder %s44, %s45
      %p56 = scmp.eq.s32.totalorder %s15, 0
      %p57 = por %p55, %p56
      %p58 = scmp.ne.s32.totalorder %s44, %s45
      %p59 = scmp.eq.s32.totalorder %s16, 1
      %p60 = por %p58, %p59
      %p62 = scmp.ne.s32.totalorder %s45, %s61
      %p63 = scmp.eq.s32.totalorder %s16, 0
      %p64 = por %p62, %p63
      %s66 = sadd.s32 %s65, 1
      %p69 = scmp.eq.s32.totalorder %s10, 1
      %p70 = scmp.ne.s32.totalorder %s65, %s67
      %p71 = scmp.eq.s32.totalorder %s10, 0
      %p72 = por %p70, %p71
      %p73 = scmp.ne.s32.totalorder %s65, %s67
      %p74 = scmp.eq.s32.totalorder %s15, 1
      %p75 = por %p73, %p74
      %p76 = scmp.ne.s32.totalorder %s67, %s68
      %p77 = scmp.eq.s32.totalorder %s15, 0
      %p78 = por %p76, %p77
      %p79 = scmp.ne.s32.totalorder %s67, %s68
      %p80 = scmp.eq.s32.totalorder %s16, 1
      %p81 = por %p79, %p80
      %p83 = scmp.ne.s32.totalorder %s68, %s82
      %p84 = scmp.eq.s32.totalorder %s16, 0
      %p85 = por %p83, %p84
      %s87 = sadd.s32 %s86, 1
      %p90 = scmp.eq.s32.totalorder %s10, 1
      %p91 = scmp.ne.s32.totalorder %s86, %s88
      %p92 = scmp.eq.s32.totalorder %s10, 0
      %p93 = por %p91, %p92
      %p94 = scmp.ne.s32.totalorder %s86, %s88
      %p95 = scmp.eq.s32.totalorder %s15, 1
      %p96 = por %p94, %p95
      %p97 = scmp.ne.s32.totalorder %s88, %s89
      %p98 = scmp.eq.s32.totalorder %s15, 0
      %p99 = por %p97, %p98
      %p100 = scmp.ne.s32.totalorder %s88, %s89
      %p101 = scmp.eq.s32.totalorder %s16, 1
      %p102 = por %p100, %p101
      %p104 = scmp.ne.s32.totalorder %s89, %s103
      %p105 = scmp.eq.s32.totalorder %s16, 0
      %p106 = por %p104, %p105
      %s107 = ssub.s32 %s10, %s17
      %p108 = scmp.eq.s32.totalorder %s107, 0
      %s110 = sadd.s32 %s109, 1
      %s111 = scalar_select %p108, %s109, %s110
      %p114 = pneg %p108
      %p115 = scmp.eq.s32.totalorder %s10, 1
      %p116 = por %p114, %p115
      %p117 = scmp.ne.s32.totalorder %s109, %s112
      %p118 = scmp.eq.s32.totalorder %s10, 0
      %p119 = por %p117, %p118
      %p120 = scmp.ne.s32.totalorder %s109, %s112
      %p121 = scmp.eq.s32.totalorder %s15, 1
      %p122 = por %p120, %p121
      %p123 = scmp.ne.s32.totalorder %s112, %s113
      %p124 = scmp.eq.s32.totalorder %s15, 0
      %p125 = por %p123, %p124
      %p126 = scmp.ne.s32.totalorder %s112, %s113
      %p127 = scmp.eq.s32.totalorder %s16, 1
      %p128 = por %p126, %p127
      %p130 = scmp.ne.s32.totalorder %s113, %s129
      %p131 = scmp.eq.s32.totalorder %s16, 0
      %p132 = por %p130, %p131
      %p133 = scmp.le.s32.totalorder 1, %s10
      %p134 = scmp.lt.s32.totalorder %s10, 3
      %p135 = pnand %p133, %p134
      %p136 = pneg %p135
      // Predicated region
      $region9: #{etm_forward.6} parent=5 // pred_check
        _
      $region10: #{etm_forward.6} parent=5 // pred_check_branch
        %138 = sbr.rel (%p135) target = $region12
      $region11: #{etm_forward.6} parent=5 // pred_region
        %s139 = ssub.s32 %s10, 1
        // Predicated region
        $region13: #{etm_forward.6} parent=11 // pred_check
          %p140 = pneg %p31
        $region14: #{etm_forward.6} parent=11 // pred_check_branch
          %142 = sbr.rel (%p140) target = $region16
        $region15: #{etm_forward.6} parent=11 // pred_region
          _
        $region16: #{etm_forward.6} parent=11 // pred_fallthru
          _
        // Predicated region
        $region17: #{etm_forward.6} parent=11 // pred_check
          %p143 = pneg %p78
        $region18: #{etm_forward.6} parent=11 // pred_check_branch
          %145 = sbr.rel (%p143) target = $region20
        $region19: #{etm_forward.6} parent=11 // pred_region
          _
        $region20: #{etm_forward.6} parent=11 // pred_fallthru
          _
        // Predicated region
        $region21: #{etm_forward.6} parent=11 // pred_check
          %p146 = pneg %p99
        $region22: #{etm_forward.6} parent=11 // pred_check_branch
          %148 = sbr.rel (%p146) target = $region24
        $region23: #{etm_forward.6} parent=11 // pred_region
          _
        $region24: #{etm_forward.6} parent=11 // pred_fallthru
          _
      $region12: #{etm_forward.6} parent=5 // pred_fallthru
        _
      %p149 = scmp.lt.s32.totalorder %s10, 2
      // Predicated region
      $region25: #{etm_forward.6} parent=5 // pred_check
        %p150 = pneg %p149
      $region26: #{etm_forward.6} parent=5 // pred_check_branch
        %152 = sbr.rel (%p150) target = $region28
      $region27: #{etm_forward.6} parent=5 // pred_region
        // Predicated region
        $region29: #{etm_forward.6} parent=27 // pred_check
          %p153 = pneg %p51
        $region30: #{etm_forward.6} parent=27 // pred_check_branch
          %155 = sbr.rel (%p153) target = $region32
        $region31: #{etm_forward.6} parent=27 // pred_region
          %s156 = sand.u32 %s41, 1
          %s157 = sand.u32 %s41, 1
          %s158 = smul.addr %s157, 128
          %s159 = scalar_lea.vmem [#allocation2], %s158
          %s160 = smul.u32 2, %s10
          %s161 = smul.addr %s160, 4
          %s162 = scalar_lea.vmem %s1, %s161
          // Predicated region
          $region33: #{etm_forward.6} parent=31 // pred_check
            _
          $region34: #{etm_forward.6} parent=31 // pred_check_branch
            %164 = sbr.rel (0) target = $region36
          $region35: #{etm_forward.6} parent=31 // pred_region
            // Predicated region
            $region37: #{etm_forward.6} parent=35 // pred_check
              _
            $region38: #{etm_forward.6} parent=35 // pred_check_branch
              %166 = sbr.rel (0) target = $region40
            $region39: #{etm_forward.6} parent=35 // pred_region
              // Predicated region
              $region52: #{etm_forward.6} parent=39 // pred_check
                _
              $region53: #{etm_forward.6} parent=39 // pred_check_branch
                %211 = sbr.rel (0) target = $region55
              $region54: #{etm_forward.6} parent=39 // pred_region
                loop: start=0, step=1, limit=1
                $region56: #{etm_forward.6} parent=54 // loop_pre_header
                  _
                $region57: #{etm_forward.6} parent=54 // loop_header
                  %s213 = sphi 0, %s217
                  %p214 = scmp.ge.s32.totalorder %s213, 1
                  %s218 = sphi %s162, %s162
                  %s219 = sphi %s159, %s159
                $region58: #{etm_forward.6} parent=54 // loop_header_branch
                  %216 = sbr.rel (%p214) target = $region62
                $region59: #{etm_forward.6} parent=54 // loop_body
                  %v220 = vld [vmem:[%s218] sm:$0xff]
                  %221 = vst [vmem:[%s219] sm:$0xff] %v220
                  %v222 = vld [vmem:[%s218 + $0x10] sm:$0xff]
                  %223 = vst [vmem:[%s219 + $0x8] sm:$0xff] %v222
                  %v224 = vld [vmem:[%s218 + $0x20] sm:$0xff]
                  %225 = vst [vmem:[%s219 + $0x10] sm:$0xff] %v224
                  %v226 = vld [vmem:[%s218 + $0x30] sm:$0xff]
                  %227 = vst [vmem:[%s219 + $0x18] sm:$0xff] %v226
                  %v228 = vld [vmem:[%s218 + $0x40] sm:$0xff]
                  %229 = vst [vmem:[%s219 + $0x20] sm:$0xff] %v228
                  %v230 = vld [vmem:[%s218 + $0x50] sm:$0xff]
                  %231 = vst [vmem:[%s219 + $0x28] sm:$0xff] %v230
                  %v232 = vld [vmem:[%s218 + $0x60] sm:$0xff]
                  %233 = vst [vmem:[%s219 + $0x30] sm:$0xff] %v232
                  %v234 = vld [vmem:[%s218 + $0x70] sm:$0xff]
                  %235 = vst [vmem:[%s219 + $0x38] sm:$0xff] %v234
                  %v236 = vld [vmem:[%s218 + $0x80] sm:$0xff]
                  %237 = vst [vmem:[%s219 + $0x40] sm:$0xff] %v236
                  %v238 = vld [vmem:[%s218 + $0x90] sm:$0xff]
                  %239 = vst [vmem:[%s219 + $0x48] sm:$0xff] %v238
                  %v240 = vld [vmem:[%s218 + $0xa0] sm:$0xff]
                  %241 = vst [vmem:[%s219 + $0x50] sm:$0xff] %v240
                  %v242 = vld [vmem:[%s218 + $0xb0] sm:$0xff]
                  %243 = vst [vmem:[%s219 + $0x58] sm:$0xff] %v242
                  %v244 = vld [vmem:[%s218 + $0xc0] sm:$0xff]
                  %245 = vst [vmem:[%s219 + $0x60] sm:$0xff] %v244
                  %v246 = vld [vmem:[%s218 + $0xd0] sm:$0xff]
                  %247 = vst [vmem:[%s219 + $0x68] sm:$0xff] %v246
                  %v248 = vld [vmem:[%s218 + $0xe0] sm:$0xff]
                  %249 = vst [vmem:[%s219 + $0x70] sm:$0xff] %v248
                  %v250 = vld [vmem:[%s218 + $0xf0] sm:$0xff]
                  %251 = vst [vmem:[%s219 + $0x78] sm:$0xff] %v250
                $region60: #{etm_forward.6} parent=54 // loop_footer
                  %s217 = sadd.s32 1, %s213
                $region61: #{etm_forward.6} parent=54 // loop_footer_branch
                  %212 = sbr.rel target = $region57
                $region62: #{etm_forward.6} parent=54 // loop_exit
                  _
              $region55: #{etm_forward.6} parent=39 // pred_fallthru
                _
              // Predicated region
              $region63: #{etm_forward.6} parent=39 // pred_check
                _
              $region64: #{etm_forward.6} parent=39 // pred_check_branch
                %253 = sbr.rel target = $region66
              $region65: #{etm_forward.6} parent=39 // pred_region
                _
              $region66: #{etm_forward.6} parent=39 // pred_fallthru
                _
            $region40: #{etm_forward.6} parent=35 // pred_fallthru
              _
            // Predicated region
            $region41: #{etm_forward.6} parent=35 // pred_check
              _
            $region42: #{etm_forward.6} parent=35 // pred_check_branch
              %168 = sbr.rel target = $region44
            $region43: #{etm_forward.6} parent=35 // pred_region
              loop: start=0, step=1, limit=1
              $region45: #{etm_forward.6} parent=43 // loop_pre_header
                _
              $region46: #{etm_forward.6} parent=43 // loop_header
                %s171 = sphi 0, %s175
                %p172 = scmp.ge.s32.totalorder %s171, 1
                %s176 = sphi %s162, %s162
                %s177 = sphi %s159, %s159
              $region47: #{etm_forward.6} parent=43 // loop_header_branch
                %174 = sbr.rel (%p172) target = $region51
              $region48: #{etm_forward.6} parent=43 // loop_body
                %v178 = vld [vmem:[%s176] sm:$0xff]
                %179 = vst [vmem:[%s177] sm:$0xff] %v178
                %v180 = vld [vmem:[%s176 + $0x10] sm:$0xff]
                %181 = vst [vmem:[%s177 + $0x8] sm:$0xff] %v180
                %v182 = vld [vmem:[%s176 + $0x20] sm:$0xff]
                %183 = vst [vmem:[%s177 + $0x10] sm:$0xff] %v182
                %v184 = vld [vmem:[%s176 + $0x30] sm:$0xff]
                %185 = vst [vmem:[%s177 + $0x18] sm:$0xff] %v184
                %v186 = vld [vmem:[%s176 + $0x40] sm:$0xff]
                %187 = vst [vmem:[%s177 + $0x20] sm:$0xff] %v186
                %v188 = vld [vmem:[%s176 + $0x50] sm:$0xff]
                %189 = vst [vmem:[%s177 + $0x28] sm:$0xff] %v188
                %v190 = vld [vmem:[%s176 + $0x60] sm:$0xff]
                %191 = vst [vmem:[%s177 + $0x30] sm:$0xff] %v190
                %v192 = vld [vmem:[%s176 + $0x70] sm:$0xff]
                %193 = vst [vmem:[%s177 + $0x38] sm:$0xff] %v192
                %v194 = vld [vmem:[%s176 + $0x80] sm:$0xff]
                %195 = vst [vmem:[%s177 + $0x40] sm:$0xff] %v194
                %v196 = vld [vmem:[%s176 + $0x90] sm:$0xff]
                %197 = vst [vmem:[%s177 + $0x48] sm:$0xff] %v196
                %v198 = vld [vmem:[%s176 + $0xa0] sm:$0xff]
                %199 = vst [vmem:[%s177 + $0x50] sm:$0xff] %v198
                %v200 = vld [vmem:[%s176 + $0xb0] sm:$0xff]
                %201 = vst [vmem:[%s177 + $0x58] sm:$0xff] %v200
                %v202 = vld [vmem:[%s176 + $0xc0] sm:$0xff]
                %203 = vst [vmem:[%s177 + $0x60] sm:$0xff] %v202
                %v204 = vld [vmem:[%s176 + $0xd0] sm:$0xff]
                %205 = vst [vmem:[%s177 + $0x68] sm:$0xff] %v204
                %v206 = vld [vmem:[%s176 + $0xe0] sm:$0xff]
                %207 = vst [vmem:[%s177 + $0x70] sm:$0xff] %v206
                %v208 = vld [vmem:[%s176 + $0xf0] sm:$0xff]
                %209 = vst [vmem:[%s177 + $0x78] sm:$0xff] %v208
              $region49: #{etm_forward.6} parent=43 // loop_footer
                %s175 = sadd.s32 1, %s171
              $region50: #{etm_forward.6} parent=43 // loop_footer_branch
                %170 = sbr.rel target = $region46
              $region51: #{etm_forward.6} parent=43 // loop_exit
                _
            $region44: #{etm_forward.6} parent=35 // pred_fallthru
              _
          $region36: #{etm_forward.6} parent=31 // pred_fallthru
            _
          %254 = vnop
        $region32: #{etm_forward.6} parent=27 // pred_fallthru
          _
      $region28: #{etm_forward.6} parent=5 // pred_fallthru
        _
      %p255 = scmp.le.s32.totalorder 1, %s10
      %p256 = scmp.lt.s32.totalorder %s10, 3
      %p257 = pnand %p255, %p256
      %p258 = pneg %p257
      // Predicated region
      $region67: #{etm_forward.6} parent=5 // pred_check
        _
      $region68: #{etm_forward.6} parent=5 // pred_check_branch
        %260 = sbr.rel (%p257) target = $region70
      $region69: #{etm_forward.6} parent=5 // pred_region
        %s261 = ssub.s32 %s10, 1
        %s262 = sand.u32 %s44, 1
        %s263 = sand.u32 %s44, 1
        %s264 = smul.addr %s263, 128
        %s265 = scalar_lea.vmem [#allocation2], %s264
        // Predicated region
        $region71: #{etm_forward.6} parent=69 // pred_check
          %p266 = pneg %p57
        $region72: #{etm_forward.6} parent=69 // pred_check_branch
          %268 = sbr.rel (%p266) target = $region74
        $region73: #{etm_forward.6} parent=69 // pred_region
          _
        $region74: #{etm_forward.6} parent=69 // pred_fallthru
          _
        %p269 = pneg %p31
        %p270 = pneg %p28
        %s271 = sand.u32 %s44, 1
        %s272 = sand.u32 %s44, 1
        %s273 = smul.addr %s272, 128
        %s274 = scalar_lea.vmem [#allocation2], %s273
        %p275 = pneg %p57
        %p276 = pneg %p54
        %p277 = pneg %p78
        %p278 = pneg %p75
        %p279 = pneg %p99
        %p280 = pneg %p96
        %p281 = pneg %p125
        %p282 = pneg %p122
        %s283 = sand.u32 %s112, 1
        %s284 = sand.u32 %s112, 1
        %s285 = smul.addr %s284, 16
        %s286 = scalar_lea.vmem [#allocation3], %s285
        %s287 = smul.u32 2, %s15
        %s288 = smul.u32 2, %s15
        %v290 = vld [vmem:[%s0] sm:$0xf]
        %v291 = vld [vmem:[%s0 + $0x4] sm:$0xf]
        %v292 = vld [vmem:[%s265] sm:$0xff]
        %v293 = vld [vmem:[%s265 + $0x8] sm:$0xff]
        %v294 = vld [vmem:[%s265 + $0x10] sm:$0xff]
        %v295 = vld [vmem:[%s265 + $0x18] sm:$0xff]
        %v296 = vld [vmem:[%s265 + $0x20] sm:$0xff]
        %v297 = vld [vmem:[%s265 + $0x28] sm:$0xff]
        %v298 = vld [vmem:[%s265 + $0x30] sm:$0xff]
        %v299 = vld [vmem:[%s265 + $0x38] sm:$0xff]
        %v300 = vld [vmem:[%s265 + $0x40] sm:$0xff]
        %v301 = vld [vmem:[%s265 + $0x48] sm:$0xff]
        %v302 = vld [vmem:[%s265 + $0x50] sm:$0xff]
        %v303 = vld [vmem:[%s265 + $0x58] sm:$0xff]
        %v304 = vld [vmem:[%s265 + $0x60] sm:$0xff]
        %v305 = vld [vmem:[%s265 + $0x68] sm:$0xff]
        %v306 = vld [vmem:[%s265 + $0x70] sm:$0xff]
        %v307 = vld [vmem:[%s265 + $0x78] sm:$0xff]
        %v310 = vunpack.c.l.b16 %v290
        %v311 = vunpack.c.l.b16 %v291
        %v312 = vpack.c.b16 %v311, %v310
        %v330 = vunpack.c.l.b16 %v292
        %v331 = vunpack.c.h.b16 %v292
        %v332 = vunpack.c.l.b16 %v293
        %v333 = vunpack.c.h.b16 %v293
        %v334 = vunpack.c.l.b16 %v294
        %v335 = vunpack.c.h.b16 %v294
        %v336 = vunpack.c.l.b16 %v295
        %v337 = vunpack.c.h.b16 %v295
        %v338 = vunpack.c.l.b16 %v296
        %v339 = vunpack.c.h.b16 %v296
        %v340 = vunpack.c.l.b16 %v297
        %v341 = vunpack.c.h.b16 %v297
        %v342 = vunpack.c.l.b16 %v298
        %v343 = vunpack.c.h.b16 %v298
        %v344 = vunpack.c.l.b16 %v299
        %v345 = vunpack.c.h.b16 %v299
        %v346 = vunpack.c.l.b16 %v300
        %v347 = vunpack.c.h.b16 %v300
        %v348 = vunpack.c.l.b16 %v301
        %v349 = vunpack.c.h.b16 %v301
        %v350 = vunpack.c.l.b16 %v302
        %v351 = vunpack.c.h.b16 %v302
        %v352 = vunpack.c.l.b16 %v303
        %v353 = vunpack.c.h.b16 %v303
        %v354 = vunpack.c.l.b16 %v304
        %v355 = vunpack.c.h.b16 %v304
        %v356 = vunpack.c.l.b16 %v305
        %v357 = vunpack.c.h.b16 %v305
        %v358 = vunpack.c.l.b16 %v306
        %v359 = vunpack.c.h.b16 %v306
        %v360 = vunpack.c.l.b16 %v307
        %v361 = vunpack.c.h.b16 %v307
        %v362 = vpack.c.b16 %v332, %v330
        %v363 = vpack.c.b16 %v333, %v331
        %v364 = vpack.c.b16 %v336, %v334
        %v365 = vpack.c.b16 %v337, %v335
        %v366 = vpack.c.b16 %v340, %v338
        %v367 = vpack.c.b16 %v341, %v339
        %v368 = vpack.c.b16 %v344, %v342
        %v369 = vpack.c.b16 %v345, %v343
        %v370 = vpack.c.b16 %v348, %v346
        %v371 = vpack.c.b16 %v349, %v347
        %v372 = vpack.c.b16 %v352, %v350
        %v373 = vpack.c.b16 %v353, %v351
        %v374 = vpack.c.b16 %v356, %v354
        %v375 = vpack.c.b16 %v357, %v355
        %v376 = vpack.c.b16 %v360, %v358
        %v377 = vpack.c.b16 %v361, %v359
        %394 = vmatprep.subr.bf16.mxu0 %v363
        %395 = vmatpush1.bf16.msra.mxu0 %v362
        %396 = vmatprep.subr.bf16.mxu0 %v365
        %397 = vmatpush1.bf16.msra.mxu0 %v364
        %398 = vmatprep.subr.bf16.mxu0 %v367
        %399 = vmatpush1.bf16.msra.mxu0 %v366
        %400 = vmatprep.subr.bf16.mxu0 %v369
        %401 = vmatpush1.bf16.msra.mxu0 %v368
        %402 = vmatprep.subr.bf16.mxu0 %v371
        %403 = vmatpush1.bf16.msra.mxu0 %v370
        %404 = vmatprep.subr.bf16.mxu0 %v373
        %405 = vmatpush1.bf16.msra.mxu0 %v372
        %406 = vmatprep.subr.bf16.mxu0 %v375
        %407 = vmatpush1.bf16.msra.mxu0 %v374
        %408 = vmatprep.subr.bf16.mxu0 %v377
        %409 = vmatpush1.bf16.msra.mxu0 %v376
        %410 = vmatprep.subr.bf16.mxu0 0
        %411 = vmatpush1.bf16.msra.mxu0 0
        %412 = vmatprep.subr.bf16.mxu0 0
        %413 = vmatpush1.bf16.msra.mxu0 0
        %414 = vmatprep.subr.bf16.mxu0 0
        %415 = vmatpush1.bf16.msra.mxu0 0
        %416 = vmatprep.subr.bf16.mxu0 0
        %417 = vmatpush1.bf16.msra.mxu0 0
        %418 = vmatprep.subr.bf16.mxu0 0
        %419 = vmatpush1.bf16.msra.mxu0 0
        %420 = vmatprep.subr.bf16.mxu0 0
        %421 = vmatpush1.bf16.msra.mxu0 0
        %422 = vmatprep.subr.bf16.mxu0 0
        %423 = vmatpush1.bf16.msra.mxu0 0
        %424 = vmatprep.subr.bf16.mxu0 0
        %425 = vmatpush1.bf16.msra.mxu0 0
        %426 = vmatprep.mubr.bf16.mxu0 0
        %427 = vmatmul.mubr.bf16.gmra.mrb[0].mxu0 %v312
        %v428 = vpop.f32.mrb[0].mxu0
        %v429 = vadd.f32 0.0, %v428
        %v430 = vpop.f32.mrb[0].mxu0
        %v431 = vadd.f32 0.0, %v430
        %v432 = vpop.f32.mrb[0].mxu0
        %v433 = vadd.f32 0.0, %v432
        %v434 = vpop.f32.mrb[0].mxu0
        %v435 = vadd.f32 0.0, %v434
        %436 = vdwg.mxu0
        %v437 = vld [vmem:[%s2] sm:$0xff]
        %v438 = vld [vmem:[%s2 + $0x8] sm:$0xff]
        %440 = vset.pattern.permute.xlu0 0
        %441 = vperm.xlu0 %440, %v437
        %v442 = vpop.permute.xlu0 %441
        %445 = vset.pattern.permute.xlu0 0
        %446 = vperm.xlu0 %445, %v438
        %v447 = vpop.permute.xlu0 %446
        %v449 = vsub.f32 %v429, %v442
        %v450 = vsub.f32 %v431, %v442
        %v451 = vsub.f32 %v433, %v447
        %v452 = vsub.f32 %v435, %v447
        %v453 = vmul.f32 %v449, 1.442695
        %v454 = vpow.pop %v453
        %v455 = vmul.f32 %v450, 1.442695
        %v456 = vpow.pop %v455
        %v457 = vmul.f32 %v451, 1.442695
        %v458 = vpow.pop %v457
        %v459 = vmul.f32 %v452, 1.442695
        %v460 = vpow.pop %v459
        %v461 = vld [vmem:[%s3] sm:$0xff]
        %v462 = vld [vmem:[%s3 + $0x8] sm:$0xff]
        %464 = vset.pattern.permute.xlu0 0
        %465 = vperm.xlu0 %464, %v461
        %v466 = vpop.permute.xlu0 %465
        %469 = vset.pattern.permute.xlu0 0
        %470 = vperm.xlu0 %469, %v462
        %v471 = vpop.permute.xlu0 %470
        %v473 = vrcp.pop %v466
        %v474 = vmul.f32 %v454, %v473
        %v475 = vmul.f32 %v456, %v473
        %v476 = vrcp.pop %v471
        %v477 = vmul.f32 %v458, %v476
        %v478 = vmul.f32 %v460, %v476
        %v479 = vpack.c.bf16 %v477, %v474
        %v480 = vpack.c.bf16 %v478, %v475
        %v483 = vunpack.c.l.b16 %v479
        %v484 = vunpack.c.l.b16 %v480
        %v485 = vunpack.c.h.b16 %v479
        %v486 = vunpack.c.h.b16 %v480
        %v487 = vpack.c.b16 %v484, %v483
        %v488 = vpack.c.b16 %v486, %v485
        %491 = vst [vmem:[%s286] sm:$0xff] %v487
        %492 = vst [vmem:[%s286 + $0x8] sm:$0xff] %v488
        %s493 = sand.u32 %s112, 1
        %s494 = sand.u32 %s112, 1
        %s495 = smul.addr %s494, 16
        %s496 = scalar_lea.vmem [#allocation3], %s495
        // Predicated region
        $region75: #{etm_forward.6} parent=69 // pred_check
          %p497 = pneg %p122
        $region76: #{etm_forward.6} parent=69 // pred_check_branch
          %499 = sbr.rel (%p497) target = $region78
        $region77: #{etm_forward.6} parent=69 // pred_region
          %s500 = smul.u32 2, %s15
          %s501 = smul.addr %s500, 4
          %s502 = scalar_lea.vmem %s4, %s501
          // Predicated region
          $region79: #{etm_forward.6} parent=77 // pred_check
            _
          $region80: #{etm_forward.6} parent=77 // pred_check_branch
            %504 = sbr.rel (0) target = $region82
          $region81: #{etm_forward.6} parent=77 // pred_region
            // Predicated region
            $region83: #{etm_forward.6} parent=81 // pred_check
              _
            $region84: #{etm_forward.6} parent=81 // pred_check_branch
              %506 = sbr.rel (0) target = $region86
            $region85: #{etm_forward.6} parent=81 // pred_region
              // Predicated region
              $region98: #{etm_forward.6} parent=85 // pred_check
                _
              $region99: #{etm_forward.6} parent=85 // pred_check_branch
                %523 = sbr.rel (0) target = $region101
              $region100: #{etm_forward.6} parent=85 // pred_region
                loop: start=0, step=1, limit=1
                $region102: #{etm_forward.6} parent=100 // loop_pre_header
                  _
                $region103: #{etm_forward.6} parent=100 // loop_header
                  %s525 = sphi 0, %s529
                  %p526 = scmp.ge.s32.totalorder %s525, 1
                  %s530 = sphi %s496, %s496
                  %s531 = sphi %s502, %s502
                $region104: #{etm_forward.6} parent=100 // loop_header_branch
                  %528 = sbr.rel (%p526) target = $region108
                $region105: #{etm_forward.6} parent=100 // loop_body
                  %v532 = vld [vmem:[%s530] sm:$0xff]
                  %533 = vst [vmem:[%s531] sm:$0xff] %v532
                  %v534 = vld [vmem:[%s530 + $0x8] sm:$0xff]
                  %535 = vst [vmem:[%s531 + $0x10] sm:$0xff] %v534
                $region106: #{etm_forward.6} parent=100 // loop_footer
                  %s529 = sadd.s32 1, %s525
                $region107: #{etm_forward.6} parent=100 // loop_footer_branch
                  %524 = sbr.rel target = $region103
                $region108: #{etm_forward.6} parent=100 // loop_exit
                  _
              $region101: #{etm_forward.6} parent=85 // pred_fallthru
                _
              // Predicated region
              $region109: #{etm_forward.6} parent=85 // pred_check
                _
              $region110: #{etm_forward.6} parent=85 // pred_check_branch
                %537 = sbr.rel target = $region112
              $region111: #{etm_forward.6} parent=85 // pred_region
                _
              $region112: #{etm_forward.6} parent=85 // pred_fallthru
                _
            $region86: #{etm_forward.6} parent=81 // pred_fallthru
              _
            // Predicated region
            $region87: #{etm_forward.6} parent=81 // pred_check
              _
            $region88: #{etm_forward.6} parent=81 // pred_check_branch
              %508 = sbr.rel target = $region90
            $region89: #{etm_forward.6} parent=81 // pred_region
              loop: start=0, step=1, limit=1
              $region91: #{etm_forward.6} parent=89 // loop_pre_header
                _
              $region92: #{etm_forward.6} parent=89 // loop_header
                %s511 = sphi 0, %s515
                %p512 = scmp.ge.s32.totalorder %s511, 1
                %s516 = sphi %s496, %s496
                %s517 = sphi %s502, %s502
              $region93: #{etm_forward.6} parent=89 // loop_header_branch
                %514 = sbr.rel (%p512) target = $region97
              $region94: #{etm_forward.6} parent=89 // loop_body
                %v518 = vld [vmem:[%s516] sm:$0xff]
                %519 = vst [vmem:[%s517] sm:$0xff] %v518
                %v520 = vld [vmem:[%s516 + $0x8] sm:$0xff]
                %521 = vst [vmem:[%s517 + $0x10] sm:$0xff] %v520
              $region95: #{etm_forward.6} parent=89 // loop_footer
                %s515 = sadd.s32 1, %s511
              $region96: #{etm_forward.6} parent=89 // loop_footer_branch
                %510 = sbr.rel target = $region92
              $region97: #{etm_forward.6} parent=89 // loop_exit
                _
            $region90: #{etm_forward.6} parent=81 // pred_fallthru
              _
          $region82: #{etm_forward.6} parent=77 // pred_fallthru
            _
          %538 = vnop
        $region78: #{etm_forward.6} parent=69 // pred_fallthru
          _
      $region70: #{etm_forward.6} parent=5 // pred_fallthru
        _
      %p539 = scmp.le.s32.totalorder 2, %s10
      // Predicated region
      $region113: #{etm_forward.6} parent=5 // pred_check
        %p540 = pneg %p539
      $region114: #{etm_forward.6} parent=5 // pred_check_branch
        %542 = sbr.rel (%p540) target = $region116
      $region115: #{etm_forward.6} parent=5 // pred_region
        %s543 = ssub.s32 %s10, 2
        // Predicated region
        $region117: #{etm_forward.6} parent=115 // pred_check
          %p544 = pneg %p128
        $region118: #{etm_forward.6} parent=115 // pred_check_branch
          %546 = sbr.rel (%p544) target = $region120
        $region119: #{etm_forward.6} parent=115 // pred_region
          %s547 = sand.u32 %s113, 1
          %s548 = sand.u32 %s113, 1
          %s549 = smul.addr %s548, 16
          %s550 = scalar_lea.vmem [#allocation3], %s549
        $region120: #{etm_forward.6} parent=115 // pred_fallthru
          _
      $region116: #{etm_forward.6} parent=5 // pred_fallthru
        _
    $region6: #{etm_forward.6} parent=1 // loop_footer
      %s14 = sadd.s32 1, %s10
    $region7: #{etm_forward.6} parent=1 // loop_footer_branch
      %9 = sbr.rel target = $region3
    $region8: #{etm_forward.6} parent=1 // loop_exit
      _

// kernel: etm_forward.7
$region0: #{etm_forward.7}
  #allocation0 [shape = 'u32[]', space=smem, size = 0x4, offset = 0x4, fixed_abs, tag = 'smem constant byte address 0x4 - core index']
  #allocation1 [shape = 'u32[144,128]{1,0:T(1,128)}', space=vmem, size = 0x12000, scoped, tag = 'internal scratch']
  %s0 = inlined_call_operand.vmem [shape: bf16[32,16], index: 0, kind: input, shape index: {}]
  %s1 = inlined_call_operand.vmem [shape: bf16[16,512], index: 1, kind: input, shape index: {}]
  %s2 = inlined_call_operand.vmem [shape: f32[32,512], index: 2, kind: input, shape index: {}]
  %s3 = inlined_call_operand.vmem [shape: f32[32,1], index: 3, kind: output, shape index: {}]
  %s4 = sld [smem:[#allocation0]]
  $region110: #{etm_forward.7} parent=0
    _
  %s6 = ssub.s32 1, %s4
  %s7 = scalar_select 0, %s6, %s4
  $region1: #{etm_forward.7} parent=0
    #allocation2 [shape = 'u8[16384]{0}', space=vmem, size = 0x4000, scoped, tag = 'input window, operand 1']
    #allocation3 [shape = 'u8[32768]{0}', space=vmem, size = 0x8000, scoped, tag = 'input window, operand 2']
    loop: start=0, step=1, limit=6
    $region2: #{etm_forward.7} parent=1 // loop_pre_header
      _
    $region3: #{etm_forward.7} parent=1 // loop_header
      %s9 = sphi 0, %s13
      %p10 = scmp.ge.s32.totalorder %s9, 6
      %s16 = sphi 0, %s28
      %s17 = sphi 0, %s24
      %s18 = sphi 0, %s16
      %s19 = sphi 0, %s17
      %s20 = sphi 0, %s18
      %s21 = sphi 0, %s19
      %s31 = sphi 0, %s33
      %s34 = sphi 0, %s31
      %s35 = sphi 0, %s34
      %s51 = sphi 0, %s35
      %s57 = sphi 0, %s59
      %s60 = sphi 0, %s57
      %s61 = sphi 0, %s60
      %s77 = sphi 0, %s61
      %s85 = sphi 0, %s87
      %s88 = sphi 0, %s85
      %s89 = sphi 0, %s88
      %s105 = sphi 0, %s89
      %s111 = sphi 0, %s113
      %s114 = sphi 0, %s111
      %s115 = sphi 0, %s114
      %s131 = sphi 0, %s115
    $region4: #{etm_forward.7} parent=1 // loop_header_branch
      %12 = sbr.rel (%p10) target = $region8
    $region5: #{etm_forward.7} parent=1 // loop_body
      %s14 = ssub.s32 %s9, 1
      %s15 = ssub.s32 %s9, 2
      %s22 = sadd.s32 1, %s17
      %p23 = scmp.ge.s32.totalorder %s22, 2
      %s24 = scalar_select %p23, 0, %s22
      %s25 = sadd.s32 1, %s16
      %s26 = scalar_select %p23, %s25, %s16
      %p27 = scmp.ge.s32.totalorder %s26, 2
      %s28 = scalar_select %p27, 0, %s26
      %s29 = ssub.s32 %s16, %s28
      %p30 = scmp.eq.s32.totalorder %s29, 0
      %s32 = sadd.s32 %s31, 1
      %s33 = scalar_select %p30, %s31, %s32
      %p36 = pneg %p30
      %p37 = scmp.eq.s32.totalorder %s9, 3
      %p38 = por %p36, %p37
      %p39 = scmp.ne.s32.totalorder %s31, %s34
      %p40 = scmp.eq.s32.totalorder %s9, 0
      %p41 = por %p39, %p40
      %p42 = scmp.ne.s32.totalorder %s31, %s34
      %p43 = scmp.eq.s32.totalorder %s14, 3
      %p44 = por %p42, %p43
      %p45 = scmp.ne.s32.totalorder %s34, %s35
      %p46 = scmp.eq.s32.totalorder %s14, 0
      %p47 = por %p45, %p46
      %p48 = scmp.ne.s32.totalorder %s34, %s35
      %p49 = scmp.eq.s32.totalorder %s15, 3
      %p50 = por %p48, %p49
      %p52 = scmp.ne.s32.totalorder %s35, %s51
      %p53 = scmp.eq.s32.totalorder %s15, 0
      %p54 = por %p52, %p53
      %s55 = ssub.s32 %s17, %s24
      %p56 = scmp.eq.s32.totalorder %s55, 0
      %s58 = sadd.s32 %s57, 1
      %s59 = scalar_select %p56, %s57, %s58
      %p62 = pneg %p56
      %p63 = scmp.eq.s32.totalorder %s9, 3
      %p64 = por %p62, %p63
      %p65 = scmp.ne.s32.totalorder %s57, %s60
      %p66 = scmp.eq.s32.totalorder %s9, 0
      %p67 = por %p65, %p66
      %p68 = scmp.ne.s32.totalorder %s57, %s60
      %p69 = scmp.eq.s32.totalorder %s14, 3
      %p70 = por %p68, %p69
      %p71 = scmp.ne.s32.totalorder %s60, %s61
      %p72 = scmp.eq.s32.totalorder %s14, 0
      %p73 = por %p71, %p72
      %p74 = scmp.ne.s32.totalorder %s60, %s61
      %p75 = scmp.eq.s32.totalorder %s15, 3
      %p76 = por %p74, %p75
      %p78 = scmp.ne.s32.totalorder %s61, %s77
      %p79 = scmp.eq.s32.totalorder %s15, 0
      %p80 = por %p78, %p79
      %s81 = ssub.s32 %s16, %s28
      %s82 = ssub.s32 %s17, %s24
      %s83 = sor.u32 %s81, %s82
      %p84 = scmp.eq.s32.totalorder %s83, 0
      %s86 = sadd.s32 %s85, 1
      %s87 = scalar_select %p84, %s85, %s86
      %p90 = pneg %p84
      %p91 = scmp.eq.s32.totalorder %s9, 3
      %p92 = por %p90, %p91
      %p93 = scmp.ne.s32.totalorder %s85, %s88
      %p94 = scmp.eq.s32.totalorder %s9, 0
      %p95 = por %p93, %p94
      %p96 = scmp.ne.s32.totalorder %s85, %s88
      %p97 = scmp.eq.s32.totalorder %s14, 3
      %p98 = por %p96, %p97
      %p99 = scmp.ne.s32.totalorder %s88, %s89
      %p100 = scmp.eq.s32.totalorder %s14, 0
      %p101 = por %p99, %p100
      %p102 = scmp.ne.s32.totalorder %s88, %s89
      %p103 = scmp.eq.s32.totalorder %s15, 3
      %p104 = por %p102, %p103
      %p106 = scmp.ne.s32.totalorder %s89, %s105
      %p107 = scmp.eq.s32.totalorder %s15, 0
      %p108 = por %p106, %p107
      %s109 = ssub.s32 %s16, %s28
      %p110 = scmp.eq.s32.totalorder %s109, 0
      %s112 = sadd.s32 %s111, 1
      %s113 = scalar_select %p110, %s111, %s112
      %p116 = pneg %p110
      %p117 = scmp.eq.s32.totalorder %s9, 3
      %p118 = por %p116, %p117
      %p119 = scmp.ne.s32.totalorder %s111, %s114
      %p120 = scmp.eq.s32.totalorder %s9, 0
      %p121 = por %p119, %p120
      %p122 = scmp.ne.s32.totalorder %s111, %s114
      %p123 = scmp.eq.s32.totalorder %s14, 3
      %p124 = por %p122, %p123
      %p125 = scmp.ne.s32.totalorder %s114, %s115
      %p126 = scmp.eq.s32.totalorder %s14, 0
      %p127 = por %p125, %p126
      %p128 = scmp.ne.s32.totalorder %s114, %s115
      %p129 = scmp.eq.s32.totalorder %s15, 3
      %p130 = por %p128, %p129
      %p132 = scmp.ne.s32.totalorder %s115, %s131
      %p133 = scmp.eq.s32.totalorder %s15, 0
      %p134 = por %p132, %p133
      %p135 = scmp.le.s32.totalorder 1, %s9
      %p136 = scmp.lt.s32.totalorder %s9, 5
      %p137 = pnand %p135, %p136
      %p138 = pneg %p137
      // Predicated region
      $region9: #{etm_forward.7} parent=5 // pred_check
        _
      $region10: #{etm_forward.7} parent=5 // pred_check_branch
        %140 = sbr.rel (%p137) target = $region12
      $region11: #{etm_forward.7} parent=5 // pred_region
        %s141 = ssub.s32 %s9, 1
      $region12: #{etm_forward.7} parent=5 // pred_fallthru
        _
      %p142 = scmp.lt.s32.totalorder %s9, 4
      // Predicated region
      $region13: #{etm_forward.7} parent=5 // pred_check
        %p143 = pneg %p142
      $region14: #{etm_forward.7} parent=5 // pred_check_branch
        %145 = sbr.rel (%p143) target = $region16
      $region15: #{etm_forward.7} parent=5 // pred_region
        // Predicated region
        $region17: #{etm_forward.7} parent=15 // pred_check
          %p146 = pneg %p41
        $region18: #{etm_forward.7} parent=15 // pred_check_branch
          %148 = sbr.rel (%p146) target = $region20
        $region19: #{etm_forward.7} parent=15 // pred_region
          %s149 = smul.u32 2, %s16
          %p150 = scmp.lt.s32.totalorder %s149, 3
          %s151 = scalar_select %p150, %s149, 3
          %s152 = smul.addr %s151, 4
          %s153 = scalar_lea.vmem %s0, %s152
          %s154 = smul.u32 2, %s16
        $region20: #{etm_forward.7} parent=15 // pred_fallthru
          _
        // Predicated region
        $region21: #{etm_forward.7} parent=15 // pred_check
          %p155 = pneg %p67
        $region22: #{etm_forward.7} parent=15 // pred_check_branch
          %157 = sbr.rel (%p155) target = $region24
        $region23: #{etm_forward.7} parent=15 // pred_region
          %s158 = sand.u32 %s57, 1
          %s159 = sand.u32 %s57, 1
          %s160 = smul.addr %s159, 16
          %s161 = scalar_lea.vmem [#allocation2], %s160
          %s162 = smul.u32 2, %s17
          %s163 = smul.addr %s162, 4
          %s164 = scalar_lea.vmem %s1, %s163
          // Predicated region
          $region25: #{etm_forward.7} parent=23 // pred_check
            _
          $region26: #{etm_forward.7} parent=23 // pred_check_branch
            %166 = sbr.rel (0) target = $region28
          $region27: #{etm_forward.7} parent=23 // pred_region
            // Predicated region
            $region29: #{etm_forward.7} parent=27 // pred_check
              _
            $region30: #{etm_forward.7} parent=27 // pred_check_branch
              %168 = sbr.rel (0) target = $region32
            $region31: #{etm_forward.7} parent=27 // pred_region
              // Predicated region
              $region44: #{etm_forward.7} parent=31 // pred_check
                _
              $region45: #{etm_forward.7} parent=31 // pred_check_branch
                %185 = sbr.rel (0) target = $region47
              $region46: #{etm_forward.7} parent=31 // pred_region
                loop: start=0, step=1, limit=1
                $region48: #{etm_forward.7} parent=46 // loop_pre_header
                  _
                $region49: #{etm_forward.7} parent=46 // loop_header
                  %s187 = sphi 0, %s191
                  %p188 = scmp.ge.s32.totalorder %s187, 1
                  %s192 = sphi %s164, %s164
                  %s193 = sphi %s161, %s161
                $region50: #{etm_forward.7} parent=46 // loop_header_branch
                  %190 = sbr.rel (%p188) target = $region54
                $region51: #{etm_forward.7} parent=46 // loop_body
                  %v194 = vld [vmem:[%s192] sm:$0xff]
                  %195 = vst [vmem:[%s193] sm:$0xff] %v194
                  %v196 = vld [vmem:[%s192 + $0x10] sm:$0xff]
                  %197 = vst [vmem:[%s193 + $0x8] sm:$0xff] %v196
                $region52: #{etm_forward.7} parent=46 // loop_footer
                  %s191 = sadd.s32 1, %s187
                $region53: #{etm_forward.7} parent=46 // loop_footer_branch
                  %186 = sbr.rel target = $region49
                $region54: #{etm_forward.7} parent=46 // loop_exit
                  _
              $region47: #{etm_forward.7} parent=31 // pred_fallthru
                _
              // Predicated region
              $region55: #{etm_forward.7} parent=31 // pred_check
                _
              $region56: #{etm_forward.7} parent=31 // pred_check_branch
                %199 = sbr.rel target = $region58
              $region57: #{etm_forward.7} parent=31 // pred_region
                _
              $region58: #{etm_forward.7} parent=31 // pred_fallthru
                _
            $region32: #{etm_forward.7} parent=27 // pred_fallthru
              _
            // Predicated region
            $region33: #{etm_forward.7} parent=27 // pred_check
              _
            $region34: #{etm_forward.7} parent=27 // pred_check_branch
              %170 = sbr.rel target = $region36
            $region35: #{etm_forward.7} parent=27 // pred_region
              loop: start=0, step=1, limit=1
              $region37: #{etm_forward.7} parent=35 // loop_pre_header
                _
              $region38: #{etm_forward.7} parent=35 // loop_header
                %s173 = sphi 0, %s177
                %p174 = scmp.ge.s32.totalorder %s173, 1
                %s178 = sphi %s164, %s164
                %s179 = sphi %s161, %s161
              $region39: #{etm_forward.7} parent=35 // loop_header_branch
                %176 = sbr.rel (%p174) target = $region43
              $region40: #{etm_forward.7} parent=35 // loop_body
                %v180 = vld [vmem:[%s178] sm:$0xff]
                %181 = vst [vmem:[%s179] sm:$0xff] %v180
                %v182 = vld [vmem:[%s178 + $0x10] sm:$0xff]
                %183 = vst [vmem:[%s179 + $0x8] sm:$0xff] %v182
              $region41: #{etm_forward.7} parent=35 // loop_footer
                %s177 = sadd.s32 1, %s173
              $region42: #{etm_forward.7} parent=35 // loop_footer_branch
                %172 = sbr.rel target = $region38
              $region43: #{etm_forward.7} parent=35 // loop_exit
                _
            $region36: #{etm_forward.7} parent=27 // pred_fallthru
              _
          $region28: #{etm_forward.7} parent=23 // pred_fallthru
            _
          %200 = vnop
        $region24: #{etm_forward.7} parent=15 // pred_fallthru
          _
        // Predicated region
        $region59: #{etm_forward.7} parent=15 // pred_check
          %p201 = pneg %p95
        $region60: #{etm_forward.7} parent=15 // pred_check_branch
          %203 = sbr.rel (%p201) target = $region62
        $region61: #{etm_forward.7} parent=15 // pred_region
          %s204 = sand.u32 %s85, 1
          %s205 = sand.u32 %s85, 1
          %s206 = smul.addr %s205, 32
          %s207 = scalar_lea.vmem [#allocation3], %s206
          %s208 = smul.u32 2, %s16
          %s209 = smul.u32 2, %s17
          %s210 = smul.addr %s208, 4
          %s211 = sadd.s32 %s209, %s210
          %s212 = smul.addr %s211, 8
          %s213 = scalar_lea.vmem %s2, %s212
          // Predicated region
          $region63: #{etm_forward.7} parent=61 // pred_check
            _
          $region64: #{etm_forward.7} parent=61 // pred_check_branch
            %215 = sbr.rel (0) target = $region66
          $region65: #{etm_forward.7} parent=61 // pred_region
            // Predicated region
            $region67: #{etm_forward.7} parent=65 // pred_check
              _
            $region68: #{etm_forward.7} parent=65 // pred_check_branch
              %217 = sbr.rel (0) target = $region70
            $region69: #{etm_forward.7} parent=65 // pred_region
              loop: start=0, step=1, limit=1
              $region71: #{etm_forward.7} parent=69 // loop_pre_header
                _
              $region72: #{etm_forward.7} parent=69 // loop_header
                %s219 = sphi 0, %s223
                %p220 = scmp.ge.s32.totalorder %s219, 1
                %s224 = sphi %s213, %s213
                %s225 = sphi %s207, %s207
              $region73: #{etm_forward.7} parent=69 // loop_header_branch
                %222 = sbr.rel (%p220) target = $region77
              $region74: #{etm_forward.7} parent=69 // loop_body
                %v226 = vld [vmem:[%s224] sm:$0xff]
                %227 = vst [vmem:[%s225] sm:$0xff] %v226
                %v228 = vld [vmem:[%s224 + $0x8] sm:$0xff]
                %229 = vst [vmem:[%s225 + $0x8] sm:$0xff] %v228
                %v230 = vld [vmem:[%s224 + $0x20] sm:$0xff]
                %231 = vst [vmem:[%s225 + $0x10] sm:$0xff] %v230
                %v232 = vld [vmem:[%s224 + $0x28] sm:$0xff]
                %233 = vst [vmem:[%s225 + $0x18] sm:$0xff] %v232
              $region75: #{etm_forward.7} parent=69 // loop_footer
                %s223 = sadd.s32 1, %s219
              $region76: #{etm_forward.7} parent=69 // loop_footer_branch
                %218 = sbr.rel target = $region72
              $region77: #{etm_forward.7} parent=69 // loop_exit
                _
            $region70: #{etm_forward.7} parent=65 // pred_fallthru
              _
            // Predicated region
            $region78: #{etm_forward.7} parent=65 // pred_check
              _
            $region79: #{etm_forward.7} parent=65 // pred_check_branch
              %235 = sbr.rel target = $region81
            $region80: #{etm_forward.7} parent=65 // pred_region
              _
            $region81: #{etm_forward.7} parent=65 // pred_fallthru
              _
          $region66: #{etm_forward.7} parent=61 // pred_fallthru
            _
          %236 = vnop
        $region62: #{etm_forward.7} parent=15 // pred_fallthru
          _
      $region16: #{etm_forward.7} parent=5 // pred_fallthru
        _
      %p237 = scmp.le.s32.totalorder 1, %s9
      %p238 = scmp.lt.s32.totalorder %s9, 5
      %p239 = pnand %p237, %p238
      %p240 = pneg %p239
      // Predicated region
      $region82: #{etm_forward.7} parent=5 // pred_check
        _
      $region83: #{etm_forward.7} parent=5 // pred_check_branch
        %242 = sbr.rel (%p239) target = $region85
      $region84: #{etm_forward.7} parent=5 // pred_region
        %s243 = ssub.s32 %s9, 1
        %s244 = sand.u32 %s60, 1
        %s245 = sand.u32 %s60, 1
        %s246 = smul.addr %s245, 16
        %s247 = scalar_lea.vmem [#allocation2], %s246
        // Predicated region
        $region86: #{etm_forward.7} parent=84 // pred_check
          %p248 = pneg %p73
        $region87: #{etm_forward.7} parent=84 // pred_check_branch
          %250 = sbr.rel (%p248) target = $region89
        $region88: #{etm_forward.7} parent=84 // pred_region
          _
        $region89: #{etm_forward.7} parent=84 // pred_fallthru
          _
        %s251 = sand.u32 %s88, 1
        %s252 = sand.u32 %s88, 1
        %s253 = smul.addr %s252, 32
        %s254 = scalar_lea.vmem [#allocation3], %s253
        // Predicated region
        $region90: #{etm_forward.7} parent=84 // pred_check
          %p255 = pneg %p101
        $region91: #{etm_forward.7} parent=84 // pred_check_branch
          %257 = sbr.rel (%p255) target = $region93
        $region92: #{etm_forward.7} parent=84 // pred_region
          _
        $region93: #{etm_forward.7} parent=84 // pred_fallthru
          _
        %s258 = smul.u32 2, %s18
        %p259 = scmp.lt.s32.totalorder %s258, 3
        %s260 = scalar_select %p259, %s258, 3
        %s261 = smul.addr %s260, 4
        %s262 = scalar_lea.vmem %s0, %s261
        %p263 = pneg %p47
        %p264 = pneg %p44
        %s265 = sand.u32 %s60, 1
        %s266 = sand.u32 %s60, 1
        %s267 = smul.addr %s266, 16
        %s268 = scalar_lea.vmem [#allocation2], %s267
        %p269 = pneg %p73
        %p270 = pneg %p70
        %s271 = sand.u32 %s88, 1
        %s272 = sand.u32 %s88, 1
        %s273 = smul.addr %s272, 32
        %s274 = scalar_lea.vmem [#allocation3], %s273
        %p275 = pneg %p101
        %p276 = pneg %p98
        %p277 = pneg %p127
        %p278 = pneg %p124
        %s279 = smul.u32 2, %s18
        %p280 = scmp.lt.s32.totalorder %s279, 3
        %s281 = scalar_select %p280, %s279, 3
        %s282 = smul.addr %s281, 8
        %s283 = scalar_lea.vmem %s3, %s282
        %s284 = smul.u32 2, %s18
        %p285 = scmp.lt.s32.totalorder %s284, 3
        %s286 = scalar_select %p285, %s284, 3
        %s287 = smul.addr %s286, 4
        %s288 = scalar_lea.vmem %s0, %s287
        %s289 = smul.u32 2, %s18
        %s290 = smul.u32 2, %s19
        %s291 = smul.u32 2, %s18
        %s292 = smul.u32 2, %s19
        %s293 = smul.u32 2, %s18
        %p294 = scmp.lt.s32.totalorder %s293, 3
        %s295 = scalar_select %p294, %s293, 3
        %s296 = smul.addr %s295, 8
        %s297 = scalar_lea.vmem %s3, %s296
        %s298 = smul.u32 2, %s18
        %p300 = scmp.eq.s32.totalorder %s19, 0
        // Predicated region
        $region94: #{etm_forward.7} parent=84 // pred_check
          %p301 = pneg %p300
        $region95: #{etm_forward.7} parent=84 // pred_check_branch
          %303 = sbr.rel (%p301) target = $region97
        $region96: #{etm_forward.7} parent=84 // pred_region
          %vm304 = vcmask 7168
          %305 = vst.msk [vmem:[%s297] sm:$0xff] %vm304, 0.0
          %306 = vst.msk [vmem:[%s297 + $0x8] sm:$0xff] %vm304, 0.0
        $region97: #{etm_forward.7} parent=84 // pred_fallthru
          _
        %v307 = vld [vmem:[%s288] sm:$0xf]
        %v308 = vld [vmem:[%s288 + $0x4] sm:$0xf]
        %v309 = vld [vmem:[%s247] sm:$0xff]
        %v310 = vld [vmem:[%s247 + $0x8] sm:$0xff]
        %v313 = vunpack.c.l.b16 %v307
        %v314 = vunpack.c.l.b16 %v308
        %v315 = vpack.c.b16 %v314, %v313
        %v318 = vunpack.c.l.b16 %v309
        %v319 = vunpack.c.h.b16 %v309
        %v320 = vunpack.c.l.b16 %v310
        %v321 = vunpack.c.h.b16 %v310
        %v322 = vpack.c.b16 %v320, %v318
        %v323 = vpack.c.b16 %v321, %v319
        %vm326 = vcmask 130048
        %v328 = vsel %vm326, %v315, 0
        %330 = vmatprep.subr.bf16.mxu0 %v323
        %331 = vmatpush1.bf16.msra.mxu0 %v322
        %332 = vmatprep.subr.bf16.mxu0 0
        %333 = vmatpush1.bf16.msra.mxu0 0
        %334 = vmatprep.subr.bf16.mxu0 0
        %335 = vmatpush1.bf16.msra.mxu0 0
        %336 = vmatprep.subr.bf16.mxu0 0
        %337 = vmatpush1.bf16.msra.mxu0 0
        %338 = vmatprep.subr.bf16.mxu0 0
        %339 = vmatpush1.bf16.msra.mxu0 0
        %340 = vmatprep.subr.bf16.mxu0 0
        %341 = vmatpush1.bf16.msra.mxu0 0
        %342 = vmatprep.subr.bf16.mxu0 0
        %343 = vmatpush1.bf16.msra.mxu0 0
        %344 = vmatprep.subr.bf16.mxu0 0
        %345 = vmatpush1.bf16.msra.mxu0 0
        %346 = vmatprep.subr.bf16.mxu0 0
        %347 = vmatpush1.bf16.msra.mxu0 0
        %348 = vmatprep.subr.bf16.mxu0 0
        %349 = vmatpush1.bf16.msra.mxu0 0
        %350 = vmatprep.subr.bf16.mxu0 0
        %351 = vmatpush1.bf16.msra.mxu0 0
        %352 = vmatprep.subr.bf16.mxu0 0
        %353 = vmatpush1.bf16.msra.mxu0 0
        %354 = vmatprep.subr.bf16.mxu0 0
        %355 = vmatpush1.bf16.msra.mxu0 0
        %356 = vmatprep.subr.bf16.mxu0 0
        %357 = vmatpush1.bf16.msra.mxu0 0
        %358 = vmatprep.subr.bf16.mxu0 0
        %359 = vmatpush1.bf16.msra.mxu0 0
        %360 = vmatprep.subr.bf16.mxu0 0
        %361 = vmatpush1.bf16.msra.mxu0 0
        %362 = vmatprep.mubr.bf16.mxu0 0
        %363 = vmatmul.mubr.bf16.gmra.mrb[0].mxu0 %v328
        %v364 = vpop.f32.mrb[0].mxu0
        %v365 = vadd.f32 1e-06, %v364
        %v366 = vpop.f32.mrb[0].mxu0
        %v367 = vadd.f32 1e-06, %v366
        %v368 = vpop.f32.mrb[0].mxu0
        %v369 = vadd.f32 1e-06, %v368
        %v370 = vpop.f32.mrb[0].mxu0
        %v371 = vadd.f32 1e-06, %v370
        %372 = vdwg.mxu0
        %v373 = vlog2.pop %v365
        %v374 = vmul.f32 %v373, 0.6931472
        %v375 = vlog2.pop %v367
        %v376 = vmul.f32 %v375, 0.6931472
        %v377 = vlog2.pop %v369
        %v378 = vmul.f32 %v377, 0.6931472
        %v379 = vlog2.pop %v371
        %v380 = vmul.f32 %v379, 0.6931472
        %v381 = vld [vmem:[%s297] sm:$0xff]
        %v382 = vld [vmem:[%s297 + $0x8] sm:$0xff]
        %v383 = vld [vmem:[%s254] sm:$0xff]
        %v384 = vld [vmem:[%s254 + $0x8] sm:$0xff]
        %v385 = vld [vmem:[%s254 + $0x10] sm:$0xff]
        %v386 = vld [vmem:[%s254 + $0x18] sm:$0xff]
        %v387 = vmul.f32 %v374, %v383
        %v388 = vmul.f32 %v376, %v384
        %v389 = vmul.f32 %v378, %v385
        %v390 = vmul.f32 %v380, %v386
        %v391 = vadd.f32 %v387, %v388
        %392 = vadd.xlane.f32.xlu0 %v391
        %v393 = vpop.xlane.xlu0 %392
        %v394 = vadd.f32 %v389, %v390
        %395 = vadd.xlane.f32.xlu0 %v394
        %v396 = vpop.xlane.xlu0 %395
        %v397 = vsub.f32 0.0, %v393
        %v398 = vsub.f32 0.0, %v396
        %v399 = vadd.f32 %v381, %v397
        %v400 = vadd.f32 %v382, %v398
        %vm401 = vcmask 7168
        %402 = vst.msk [vmem:[%s297] sm:$0xff] %vm401, %v399
        %403 = vst.msk [vmem:[%s297 + $0x8] sm:$0xff] %vm401, %v400
        %s404 = smul.u32 2, %s18
        %p405 = scmp.lt.s32.totalorder %s404, 3
        %s406 = scalar_select %p405, %s404, 3
        %s407 = smul.addr %s406, 8
        %s408 = scalar_lea.vmem %s3, %s407
        // Predicated region
        $region98: #{etm_forward.7} parent=84 // pred_check
          %p409 = pneg %p124
        $region99: #{etm_forward.7} parent=84 // pred_check_branch
          %411 = sbr.rel (%p409) target = $region101
        $region100: #{etm_forward.7} parent=84 // pred_region
          %s412 = smul.u32 2, %s18
        $region101: #{etm_forward.7} parent=84 // pred_fallthru
          _
      $region85: #{etm_forward.7} parent=5 // pred_fallthru
        _
      %p413 = scmp.le.s32.totalorder 2, %s9
      // Predicated region
      $region102: #{etm_forward.7} parent=5 // pred_check
        %p414 = pneg %p413
      $region103: #{etm_forward.7} parent=5 // pred_check_branch
        %416 = sbr.rel (%p414) target = $region105
      $region104: #{etm_forward.7} parent=5 // pred_region
        %s417 = ssub.s32 %s9, 2
        // Predicated region
        $region106: #{etm_forward.7} parent=104 // pred_check
          %p418 = pneg %p130
        $region107: #{etm_forward.7} parent=104 // pred_check_branch
          %420 = sbr.rel (%p418) target = $region109
        $region108: #{etm_forward.7} parent=104 // pred_region
          %s421 = smul.u32 2, %s20
          %p422 = scmp.lt.s32.totalorder %s421, 3
          %s423 = scalar_select %p422, %s421, 3
          %s424 = smul.addr %s423, 8
          %s425 = scalar_lea.vmem %s3, %s424
        $region109: #{etm_forward.7} parent=104 // pred_fallthru
          _
      $region105: #{etm_forward.7} parent=5 // pred_fallthru
        _
    $region6: #{etm_forward.7} parent=1 // loop_footer
      %s13 = sadd.s32 1, %s9
    $region7: #{etm_forward.7} parent=1 // loop_footer_branch
      %8 = sbr.rel target = $region3
    $region8: #{etm_forward.7} parent=1 // loop_exit
      _

// kernel: etm_forward.5
$region0: #{etm_forward.5}
  #allocation0 [shape = 'u32[]', space=smem, size = 0x4, offset = 0x4, fixed_abs, tag = 'smem constant byte address 0x4 - core index']
  #allocation1 [shape = 'u32[144,128]{1,0:T(1,128)}', space=vmem, size = 0x12000, scoped, tag = 'internal scratch']
  %s0 = inlined_call_operand.vmem [shape: bf16[16,128], index: 0, kind: input, shape index: {}]
  %s1 = inlined_call_operand.vmem [shape: bf16[128,512], index: 1, kind: input, shape index: {}]
  %s2 = inlined_call_operand.vmem [shape: f32[16,1], index: 2, kind: output, shape index: {0}]
  %s3 = inlined_call_operand.vmem [shape: f32[16,1], index: 3, kind: output, shape index: {1}]
  %4 = xla_tuple %s2, %s3
  %s5 = sld [smem:[#allocation0]]
  $region91: #{etm_forward.5} parent=0
    _
  %s7 = ssub.s32 1, %s5
  %s8 = scalar_select 0, %s7, %s5
  $region1: #{etm_forward.5} parent=0
    #allocation2 [shape = 'u8[131072]{0}', space=vmem, size = 0x20000, scoped, tag = 'input window, operand 1']
    loop: start=0, step=1, limit=4
    $region2: #{etm_forward.5} parent=1 // loop_pre_header
      _
    $region3: #{etm_forward.5} parent=1 // loop_header
      %s10 = sphi 0, %s14
      %p11 = scmp.ge.s32.totalorder %s10, 4
      %s18 = sphi 0, %s18
      %s20 = sphi 0, %s18
      %s21 = sphi 0, %s20
      %s35 = sphi 0, %s21
      %s41 = sphi 0, %s43
      %s44 = sphi 0, %s41
      %s45 = sphi 0, %s44
      %s61 = sphi 0, %s45
      %s65 = sphi 0, %s65
      %s67 = sphi 0, %s65
      %s68 = sphi 0, %s67
      %s82 = sphi 0, %s68
      %s86 = sphi 0, %s86
      %s88 = sphi 0, %s86
      %s89 = sphi 0, %s88
      %s103 = sphi 0, %s89
    $region4: #{etm_forward.5} parent=1 // loop_header_branch
      %13 = sbr.rel (%p11) target = $region8
    $region5: #{etm_forward.5} parent=1 // loop_body
      %s15 = ssub.s32 %s10, 1
      %s16 = ssub.s32 %s10, 2
      %s17 = sadd.s32 %s10, 1
      %s19 = sadd.s32 %s18, 1
      %p22 = scmp.eq.s32.totalorder %s10, 1
      %p23 = scmp.ne.s32.totalorder %s18, %s20
      %p24 = scmp.eq.s32.totalorder %s10, 0
      %p25 = por %p23, %p24
      %p26 = scmp.ne.s32.totalorder %s18, %s20
      %p27 = scmp.eq.s32.totalorder %s15, 1
      %p28 = por %p26, %p27
      %p29 = scmp.ne.s32.totalorder %s20, %s21
      %p30 = scmp.eq.s32.totalorder %s15, 0
      %p31 = por %p29, %p30
      %p32 = scmp.ne.s32.totalorder %s20, %s21
      %p33 = scmp.eq.s32.totalorder %s16, 1
      %p34 = por %p32, %p33
      %p36 = scmp.ne.s32.totalorder %s21, %s35
      %p37 = scmp.eq.s32.totalorder %s16, 0
      %p38 = por %p36, %p37
      %s39 = ssub.s32 %s10, %s17
      %p40 = scmp.eq.s32.totalorder %s39, 0
      %s42 = sadd.s32 %s41, 1
      %s43 = scalar_select %p40, %s41, %s42
      %p46 = pneg %p40
      %p47 = scmp.eq.s32.totalorder %s10, 1
      %p48 = por %p46, %p47
      %p49 = scmp.ne.s32.totalorder %s41, %s44
      %p50 = scmp.eq.s32.totalorder %s10, 0
      %p51 = por %p49, %p50
      %p52 = scmp.ne.s32.totalorder %s41, %s44
      %p53 = scmp.eq.s32.totalorder %s15, 1
      %p54 = por %p52, %p53
      %p55 = scmp.ne.s32.totalorder %s44, %s45
      %p56 = scmp.eq.s32.totalorder %s15, 0
      %p57 = por %p55, %p56
      %p58 = scmp.ne.s32.totalorder %s44, %s45
      %p59 = scmp.eq.s32.totalorder %s16, 1
      %p60 = por %p58, %p59
      %p62 = scmp.ne.s32.totalorder %s45, %s61
      %p63 = scmp.eq.s32.totalorder %s16, 0
      %p64 = por %p62, %p63
      %s66 = sadd.s32 %s65, 1
      %p69 = scmp.eq.s32.totalorder %s10, 1
      %p70 = scmp.ne.s32.totalorder %s65, %s67
      %p71 = scmp.eq.s32.totalorder %s10, 0
      %p72 = por %p70, %p71
      %p73 = scmp.ne.s32.totalorder %s65, %s67
      %p74 = scmp.eq.s32.totalorder %s15, 1
      %p75 = por %p73, %p74
      %p76 = scmp.ne.s32.totalorder %s67, %s68
      %p77 = scmp.eq.s32.totalorder %s15, 0
      %p78 = por %p76, %p77
      %p79 = scmp.ne.s32.totalorder %s67, %s68
      %p80 = scmp.eq.s32.totalorder %s16, 1
      %p81 = por %p79, %p80
      %p83 = scmp.ne.s32.totalorder %s68, %s82
      %p84 = scmp.eq.s32.totalorder %s16, 0
      %p85 = por %p83, %p84
      %s87 = sadd.s32 %s86, 1
      %p90 = scmp.eq.s32.totalorder %s10, 1
      %p91 = scmp.ne.s32.totalorder %s86, %s88
      %p92 = scmp.eq.s32.totalorder %s10, 0
      %p93 = por %p91, %p92
      %p94 = scmp.ne.s32.totalorder %s86, %s88
      %p95 = scmp.eq.s32.totalorder %s15, 1
      %p96 = por %p94, %p95
      %p97 = scmp.ne.s32.totalorder %s88, %s89
      %p98 = scmp.eq.s32.totalorder %s15, 0
      %p99 = por %p97, %p98
      %p100 = scmp.ne.s32.totalorder %s88, %s89
      %p101 = scmp.eq.s32.totalorder %s16, 1
      %p102 = por %p100, %p101
      %p104 = scmp.ne.s32.totalorder %s89, %s103
      %p105 = scmp.eq.s32.totalorder %s16, 0
      %p106 = por %p104, %p105
      %p107 = scmp.le.s32.totalorder 1, %s10
      %p108 = scmp.lt.s32.totalorder %s10, 3
      %p109 = pnand %p107, %p108
      %p110 = pneg %p109
      // Predicated region
      $region9: #{etm_forward.5} parent=5 // pred_check
        _
      $region10: #{etm_forward.5} parent=5 // pred_check_branch
        %112 = sbr.rel (%p109) target = $region12
      $region11: #{etm_forward.5} parent=5 // pred_region
        %s113 = ssub.s32 %s10, 1
        // Predicated region
        $region13: #{etm_forward.5} parent=11 // pred_check
          %p114 = pneg %p31
        $region14: #{etm_forward.5} parent=11 // pred_check_branch
          %116 = sbr.rel (%p114) target = $region16
        $region15: #{etm_forward.5} parent=11 // pred_region
          _
        $region16: #{etm_forward.5} parent=11 // pred_fallthru
          _
      $region12: #{etm_forward.5} parent=5 // pred_fallthru
        _
      %p117 = scmp.lt.s32.totalorder %s10, 2
      // Predicated region
      $region17: #{etm_forward.5} parent=5 // pred_check
        %p118 = pneg %p117
      $region18: #{etm_forward.5} parent=5 // pred_check_branch
        %120 = sbr.rel (%p118) target = $region20
      $region19: #{etm_forward.5} parent=5 // pred_region
        // Predicated region
        $region21: #{etm_forward.5} parent=19 // pred_check
          %p121 = pneg %p51
        $region22: #{etm_forward.5} parent=19 // pred_check_branch
          %123 = sbr.rel (%p121) target = $region24
        $region23: #{etm_forward.5} parent=19 // pred_region
          %s124 = sand.u32 %s41, 1
          %s125 = sand.u32 %s41, 1
          %s126 = smul.addr %s125, 128
          %s127 = scalar_lea.vmem [#allocation2], %s126
          %s128 = smul.u32 2, %s10
          %s129 = smul.addr %s128, 4
          %s130 = scalar_lea.vmem %s1, %s129
          // Predicated region
          $region25: #{etm_forward.5} parent=23 // pred_check
            _
          $region26: #{etm_forward.5} parent=23 // pred_check_branch
            %132 = sbr.rel (0) target = $region28
          $region27: #{etm_forward.5} parent=23 // pred_region
            // Predicated region
            $region29: #{etm_forward.5} parent=27 // pred_check
              _
            $region30: #{etm_forward.5} parent=27 // pred_check_branch
              %134 = sbr.rel (0) target = $region32
            $region31: #{etm_forward.5} parent=27 // pred_region
              // Predicated region
              $region44: #{etm_forward.5} parent=31 // pred_check
                _
              $region45: #{etm_forward.5} parent=31 // pred_check_branch
                %179 = sbr.rel (0) target = $region47
              $region46: #{etm_forward.5} parent=31 // pred_region
                loop: start=0, step=1, limit=1
                $region48: #{etm_forward.5} parent=46 // loop_pre_header
                  _
                $region49: #{etm_forward.5} parent=46 // loop_header
                  %s181 = sphi 0, %s185
                  %p182 = scmp.ge.s32.totalorder %s181, 1
                  %s186 = sphi %s130, %s130
                  %s187 = sphi %s127, %s127
                $region50: #{etm_forward.5} parent=46 // loop_header_branch
                  %184 = sbr.rel (%p182) target = $region54
                $region51: #{etm_forward.5} parent=46 // loop_body
                  %v188 = vld [vmem:[%s186] sm:$0xff]
                  %189 = vst [vmem:[%s187] sm:$0xff] %v188
                  %v190 = vld [vmem:[%s186 + $0x10] sm:$0xff]
                  %191 = vst [vmem:[%s187 + $0x8] sm:$0xff] %v190
                  %v192 = vld [vmem:[%s186 + $0x20] sm:$0xff]
                  %193 = vst [vmem:[%s187 + $0x10] sm:$0xff] %v192
                  %v194 = vld [vmem:[%s186 + $0x30] sm:$0xff]
                  %195 = vst [vmem:[%s187 + $0x18] sm:$0xff] %v194
                  %v196 = vld [vmem:[%s186 + $0x40] sm:$0xff]
                  %197 = vst [vmem:[%s187 + $0x20] sm:$0xff] %v196
                  %v198 = vld [vmem:[%s186 + $0x50] sm:$0xff]
                  %199 = vst [vmem:[%s187 + $0x28] sm:$0xff] %v198
                  %v200 = vld [vmem:[%s186 + $0x60] sm:$0xff]
                  %201 = vst [vmem:[%s187 + $0x30] sm:$0xff] %v200
                  %v202 = vld [vmem:[%s186 + $0x70] sm:$0xff]
                  %203 = vst [vmem:[%s187 + $0x38] sm:$0xff] %v202
                  %v204 = vld [vmem:[%s186 + $0x80] sm:$0xff]
                  %205 = vst [vmem:[%s187 + $0x40] sm:$0xff] %v204
                  %v206 = vld [vmem:[%s186 + $0x90] sm:$0xff]
                  %207 = vst [vmem:[%s187 + $0x48] sm:$0xff] %v206
                  %v208 = vld [vmem:[%s186 + $0xa0] sm:$0xff]
                  %209 = vst [vmem:[%s187 + $0x50] sm:$0xff] %v208
                  %v210 = vld [vmem:[%s186 + $0xb0] sm:$0xff]
                  %211 = vst [vmem:[%s187 + $0x58] sm:$0xff] %v210
                  %v212 = vld [vmem:[%s186 + $0xc0] sm:$0xff]
                  %213 = vst [vmem:[%s187 + $0x60] sm:$0xff] %v212
                  %v214 = vld [vmem:[%s186 + $0xd0] sm:$0xff]
                  %215 = vst [vmem:[%s187 + $0x68] sm:$0xff] %v214
                  %v216 = vld [vmem:[%s186 + $0xe0] sm:$0xff]
                  %217 = vst [vmem:[%s187 + $0x70] sm:$0xff] %v216
                  %v218 = vld [vmem:[%s186 + $0xf0] sm:$0xff]
                  %219 = vst [vmem:[%s187 + $0x78] sm:$0xff] %v218
                $region52: #{etm_forward.5} parent=46 // loop_footer
                  %s185 = sadd.s32 1, %s181
                $region53: #{etm_forward.5} parent=46 // loop_footer_branch
                  %180 = sbr.rel target = $region49
                $region54: #{etm_forward.5} parent=46 // loop_exit
                  _
              $region47: #{etm_forward.5} parent=31 // pred_fallthru
                _
              // Predicated region
              $region55: #{etm_forward.5} parent=31 // pred_check
                _
              $region56: #{etm_forward.5} parent=31 // pred_check_branch
                %221 = sbr.rel target = $region58
              $region57: #{etm_forward.5} parent=31 // pred_region
                _
              $region58: #{etm_forward.5} parent=31 // pred_fallthru
                _
            $region32: #{etm_forward.5} parent=27 // pred_fallthru
              _
            // Predicated region
            $region33: #{etm_forward.5} parent=27 // pred_check
              _
            $region34: #{etm_forward.5} parent=27 // pred_check_branch
              %136 = sbr.rel target = $region36
            $region35: #{etm_forward.5} parent=27 // pred_region
              loop: start=0, step=1, limit=1
              $region37: #{etm_forward.5} parent=35 // loop_pre_header
                _
              $region38: #{etm_forward.5} parent=35 // loop_header
                %s139 = sphi 0, %s143
                %p140 = scmp.ge.s32.totalorder %s139, 1
                %s144 = sphi %s130, %s130
                %s145 = sphi %s127, %s127
              $region39: #{etm_forward.5} parent=35 // loop_header_branch
                %142 = sbr.rel (%p140) target = $region43
              $region40: #{etm_forward.5} parent=35 // loop_body
                %v146 = vld [vmem:[%s144] sm:$0xff]
                %147 = vst [vmem:[%s145] sm:$0xff] %v146
                %v148 = vld [vmem:[%s144 + $0x10] sm:$0xff]
                %149 = vst [vmem:[%s145 + $0x8] sm:$0xff] %v148
                %v150 = vld [vmem:[%s144 + $0x20] sm:$0xff]
                %151 = vst [vmem:[%s145 + $0x10] sm:$0xff] %v150
                %v152 = vld [vmem:[%s144 + $0x30] sm:$0xff]
                %153 = vst [vmem:[%s145 + $0x18] sm:$0xff] %v152
                %v154 = vld [vmem:[%s144 + $0x40] sm:$0xff]
                %155 = vst [vmem:[%s145 + $0x20] sm:$0xff] %v154
                %v156 = vld [vmem:[%s144 + $0x50] sm:$0xff]
                %157 = vst [vmem:[%s145 + $0x28] sm:$0xff] %v156
                %v158 = vld [vmem:[%s144 + $0x60] sm:$0xff]
                %159 = vst [vmem:[%s145 + $0x30] sm:$0xff] %v158
                %v160 = vld [vmem:[%s144 + $0x70] sm:$0xff]
                %161 = vst [vmem:[%s145 + $0x38] sm:$0xff] %v160
                %v162 = vld [vmem:[%s144 + $0x80] sm:$0xff]
                %163 = vst [vmem:[%s145 + $0x40] sm:$0xff] %v162
                %v164 = vld [vmem:[%s144 + $0x90] sm:$0xff]
                %165 = vst [vmem:[%s145 + $0x48] sm:$0xff] %v164
                %v166 = vld [vmem:[%s144 + $0xa0] sm:$0xff]
                %167 = vst [vmem:[%s145 + $0x50] sm:$0xff] %v166
                %v168 = vld [vmem:[%s144 + $0xb0] sm:$0xff]
                %169 = vst [vmem:[%s145 + $0x58] sm:$0xff] %v168
                %v170 = vld [vmem:[%s144 + $0xc0] sm:$0xff]
                %171 = vst [vmem:[%s145 + $0x60] sm:$0xff] %v170
                %v172 = vld [vmem:[%s144 + $0xd0] sm:$0xff]
                %173 = vst [vmem:[%s145 + $0x68] sm:$0xff] %v172
                %v174 = vld [vmem:[%s144 + $0xe0] sm:$0xff]
                %175 = vst [vmem:[%s145 + $0x70] sm:$0xff] %v174
                %v176 = vld [vmem:[%s144 + $0xf0] sm:$0xff]
                %177 = vst [vmem:[%s145 + $0x78] sm:$0xff] %v176
              $region41: #{etm_forward.5} parent=35 // loop_footer
                %s143 = sadd.s32 1, %s139
              $region42: #{etm_forward.5} parent=35 // loop_footer_branch
                %138 = sbr.rel target = $region38
              $region43: #{etm_forward.5} parent=35 // loop_exit
                _
            $region36: #{etm_forward.5} parent=27 // pred_fallthru
              _
          $region28: #{etm_forward.5} parent=23 // pred_fallthru
            _
          %222 = vnop
        $region24: #{etm_forward.5} parent=19 // pred_fallthru
          _
      $region20: #{etm_forward.5} parent=5 // pred_fallthru
        _
      %p223 = scmp.le.s32.totalorder 1, %s10
      %p224 = scmp.lt.s32.totalorder %s10, 3
      %p225 = pnand %p223, %p224
      %p226 = pneg %p225
      // Predicated region
      $region59: #{etm_forward.5} parent=5 // pred_check
        _
      $region60: #{etm_forward.5} parent=5 // pred_check_branch
        %228 = sbr.rel (%p225) target = $region62
      $region61: #{etm_forward.5} parent=5 // pred_region
        %s229 = ssub.s32 %s10, 1
        %s230 = sand.u32 %s44, 1
        %s231 = sand.u32 %s44, 1
        %s232 = smul.addr %s231, 128
        %s233 = scalar_lea.vmem [#allocation2], %s232
        // Predicated region
        $region63: #{etm_forward.5} parent=61 // pred_check
          %p234 = pneg %p57
        $region64: #{etm_forward.5} parent=61 // pred_check_branch
          %236 = sbr.rel (%p234) target = $region66
        $region65: #{etm_forward.5} parent=61 // pred_region
          _
        $region66: #{etm_forward.5} parent=61 // pred_fallthru
          _
        %p237 = pneg %p31
        %p238 = pneg %p28
        %s239 = sand.u32 %s44, 1
        %s240 = sand.u32 %s44, 1
        %s241 = smul.addr %s240, 128
        %s242 = scalar_lea.vmem [#allocation2], %s241
        %p243 = pneg %p57
        %p244 = pneg %p54
        %p245 = pneg %p78
        %p246 = pneg %p75
        %p247 = pneg %p99
        %p248 = pneg %p96
        %s249 = smul.u32 2, %s15
        %p251 = scmp.eq.s32.totalorder %s15, 0
        // Predicated region
        $region67: #{etm_forward.5} parent=61 // pred_check
          %p252 = pneg %p251
        $region68: #{etm_forward.5} parent=61 // pred_check_branch
          %254 = sbr.rel (%p252) target = $region70
        $region69: #{etm_forward.5} parent=61 // pred_region
          %vm255 = vcmask 7168
          %256 = vst.msk [vmem:[%s2] sm:$0xff] %vm255, -inf
          %257 = vst.msk [vmem:[%s2 + $0x8] sm:$0xff] %vm255, -inf
          %258 = vst.msk [vmem:[%s3] sm:$0xff] %vm255, 0.0
          %259 = vst.msk [vmem:[%s3 + $0x8] sm:$0xff] %vm255, 0.0
        $region70: #{etm_forward.5} parent=61 // pred_fallthru
          _
        %v260 = vld [vmem:[%s0] sm:$0xf]
        %v261 = vld [vmem:[%s0 + $0x4] sm:$0xf]
        %v262 = vld [vmem:[%s233] sm:$0xff]
        %v263 = vld [vmem:[%s233 + $0x8] sm:$0xff]
        %v264 = vld [vmem:[%s233 + $0x10] sm:$0xff]
        %v265 = vld [vmem:[%s233 + $0x18] sm:$0xff]
        %v266 = vld [vmem:[%s233 + $0x20] sm:$0xff]
        %v267 = vld [vmem:[%s233 + $0x28] sm:$0xff]
        %v268 = vld [vmem:[%s233 + $0x30] sm:$0xff]
        %v269 = vld [vmem:[%s233 + $0x38] sm:$0xff]
        %v270 = vld [vmem:[%s233 + $0x40] sm:$0xff]
        %v271 = vld [vmem:[%s233 + $0x48] sm:$0xff]
        %v272 = vld [vmem:[%s233 + $0x50] sm:$0xff]
        %v273 = vld [vmem:[%s233 + $0x58] sm:$0xff]
        %v274 = vld [vmem:[%s233 + $0x60] sm:$0xff]
        %v275 = vld [vmem:[%s233 + $0x68] sm:$0xff]
        %v276 = vld [vmem:[%s233 + $0x70] sm:$0xff]
        %v277 = vld [vmem:[%s233 + $0x78] sm:$0xff]
        %v280 = vunpack.c.l.b16 %v260
        %v281 = vunpack.c.l.b16 %v261
        %v282 = vpack.c.b16 %v281, %v280
        %v300 = vunpack.c.l.b16 %v262
        %v301 = vunpack.c.h.b16 %v262
        %v302 = vunpack.c.l.b16 %v263
        %v303 = vunpack.c.h.b16 %v263
        %v304 = vunpack.c.l.b16 %v264
        %v305 = vunpack.c.h.b16 %v264
        %v306 = vunpack.c.l.b16 %v265
        %v307 = vunpack.c.h.b16 %v265
        %v308 = vunpack.c.l.b16 %v266
        %v309 = vunpack.c.h.b16 %v266
        %v310 = vunpack.c.l.b16 %v267
        %v311 = vunpack.c.h.b16 %v267
        %v312 = vunpack.c.l.b16 %v268
        %v313 = vunpack.c.h.b16 %v268
        %v314 = vunpack.c.l.b16 %v269
        %v315 = vunpack.c.h.b16 %v269
        %v316 = vunpack.c.l.b16 %v270
        %v317 = vunpack.c.h.b16 %v270
        %v318 = vunpack.c.l.b16 %v271
        %v319 = vunpack.c.h.b16 %v271
        %v320 = vunpack.c.l.b16 %v272
        %v321 = vunpack.c.h.b16 %v272
        %v322 = vunpack.c.l.b16 %v273
        %v323 = vunpack.c.h.b16 %v273
        %v324 = vunpack.c.l.b16 %v274
        %v325 = vunpack.c.h.b16 %v274
        %v326 = vunpack.c.l.b16 %v275
        %v327 = vunpack.c.h.b16 %v275
        %v328 = vunpack.c.l.b16 %v276
        %v329 = vunpack.c.h.b16 %v276
        %v330 = vunpack.c.l.b16 %v277
        %v331 = vunpack.c.h.b16 %v277
        %v332 = vpack.c.b16 %v302, %v300
        %v333 = vpack.c.b16 %v303, %v301
        %v334 = vpack.c.b16 %v306, %v304
        %v335 = vpack.c.b16 %v307, %v305
        %v336 = vpack.c.b16 %v310, %v308
        %v337 = vpack.c.b16 %v311, %v309
        %v338 = vpack.c.b16 %v314, %v312
        %v339 = vpack.c.b16 %v315, %v313
        %v340 = vpack.c.b16 %v318, %v316
        %v341 = vpack.c.b16 %v319, %v317
        %v342 = vpack.c.b16 %v322, %v320
        %v343 = vpack.c.b16 %v323, %v321
        %v344 = vpack.c.b16 %v326, %v324
        %v345 = vpack.c.b16 %v327, %v325
        %v346 = vpack.c.b16 %v330, %v328
        %v347 = vpack.c.b16 %v331, %v329
        %364 = vmatprep.subr.bf16.mxu0 %v333
        %365 = vmatpush1.bf16.msra.mxu0 %v332
        %366 = vmatprep.subr.bf16.mxu0 %v335
        %367 = vmatpush1.bf16.msra.mxu0 %v334
        %368 = vmatprep.subr.bf16.mxu0 %v337
        %369 = vmatpush1.bf16.msra.mxu0 %v336
        %370 = vmatprep.subr.bf16.mxu0 %v339
        %371 = vmatpush1.bf16.msra.mxu0 %v338
        %372 = vmatprep.subr.bf16.mxu0 %v341
        %373 = vmatpush1.bf16.msra.mxu0 %v340
        %374 = vmatprep.subr.bf16.mxu0 %v343
        %375 = vmatpush1.bf16.msra.mxu0 %v342
        %376 = vmatprep.subr.bf16.mxu0 %v345
        %377 = vmatpush1.bf16.msra.mxu0 %v344
        %378 = vmatprep.subr.bf16.mxu0 %v347
        %379 = vmatpush1.bf16.msra.mxu0 %v346
        %380 = vmatprep.subr.bf16.mxu0 0
        %381 = vmatpush1.bf16.msra.mxu0 0
        %382 = vmatprep.subr.bf16.mxu0 0
        %383 = vmatpush1.bf16.msra.mxu0 0
        %384 = vmatprep.subr.bf16.mxu0 0
        %385 = vmatpush1.bf16.msra.mxu0 0
        %386 = vmatprep.subr.bf16.mxu0 0
        %387 = vmatpush1.bf16.msra.mxu0 0
        %388 = vmatprep.subr.bf16.mxu0 0
        %389 = vmatpush1.bf16.msra.mxu0 0
        %390 = vmatprep.subr.bf16.mxu0 0
        %391 = vmatpush1.bf16.msra.mxu0 0
        %392 = vmatprep.subr.bf16.mxu0 0
        %393 = vmatpush1.bf16.msra.mxu0 0
        %394 = vmatprep.subr.bf16.mxu0 0
        %395 = vmatpush1.bf16.msra.mxu0 0
        %396 = vmatprep.mubr.bf16.mxu0 0
        %397 = vmatmul.mubr.bf16.gmra.mrb[0].mxu0 %v282
        %v398 = vpop.f32.mrb[0].mxu0
        %v399 = vadd.f32 0.0, %v398
        %v400 = vpop.f32.mrb[0].mxu0
        %v401 = vadd.f32 0.0, %v400
        %v402 = vpop.f32.mrb[0].mxu0
        %v403 = vadd.f32 0.0, %v402
        %v404 = vpop.f32.mrb[0].mxu0
        %v405 = vadd.f32 0.0, %v404
        %406 = vdwg.mxu0
        %v407 = vld [vmem:[%s2] sm:$0xff]
        %v408 = vld [vmem:[%s2 + $0x8] sm:$0xff]
        %v409 = vmax.f32 %v399, %v401
        %410 = vmax.xlane.f32.xlu0 %v409
        %v411 = vpop.xlane.xlu0 %410
        %v412 = vmax.f32 %v403, %v405
        %413 = vmax.xlane.f32.xlu0 %v412
        %v414 = vpop.xlane.xlu0 %413
        %v415 = vmax.f32 %v407, %v411
        %v416 = vmax.f32 %v408, %v414
        %v417 = vld [vmem:[%s3] sm:$0xff]
        %v418 = vld [vmem:[%s3 + $0x8] sm:$0xff]
        %v419 = vsub.f32 %v407, %v415
        %v420 = vsub.f32 %v408, %v416
        %v421 = vmul.f32 %v419, 1.442695
        %v422 = vpow.pop %v421
        %v423 = vmul.f32 %v420, 1.442695
        %v424 = vpow.pop %v423
        %v425 = vmul.f32 %v417, %v422
        %v426 = vmul.f32 %v418, %v424
        %428 = vset.pattern.permute.xlu0 0
        %429 = vperm.xlu0 %428, %v415
        %v430 = vpop.permute.xlu0 %429
        %433 = vset.pattern.permute.xlu0 0
        %434 = vperm.xlu0 %433, %v416
        %v435 = vpop.permute.xlu0 %434
        %v437 = vsub.f32 %v399, %v430
        %v438 = vsub.f32 %v401, %v430
        %v439 = vsub.f32 %v403, %v435
        %v440 = vsub.f32 %v405, %v435
        %v441 = vmul.f32 %v437, 1.442695
        %v442 = vpow.pop %v441
        %v443 = vmul.f32 %v438, 1.442695
        %v444 = vpow.pop %v443
        %v445 = vmul.f32 %v439, 1.442695
        %v446 = vpow.pop %v445
        %v447 = vmul.f32 %v440, 1.442695
        %v448 = vpow.pop %v447
        %v449 = vadd.f32 %v442, %v444
        %450 = vadd.xlane.f32.xlu0 %v449
        %v451 = vpop.xlane.xlu0 %450
        %v452 = vadd.f32 %v446, %v448
        %453 = vadd.xlane.f32.xlu0 %v452
        %v454 = vpop.xlane.xlu0 %453
        %v455 = vadd.f32 %v425, %v451
        %v456 = vadd.f32 %v426, %v454
        %vm457 = vcmask 7168
        %458 = vst.msk [vmem:[%s3] sm:$0xff] %vm457, %v455
        %459 = vst.msk [vmem:[%s3 + $0x8] sm:$0xff] %vm457, %v456
        %460 = vst.msk [vmem:[%s2] sm:$0xff] %vm457, %v415
        %461 = vst.msk [vmem:[%s2 + $0x8] sm:$0xff] %vm457, %v416
        // Predicated region
        $region71: #{etm_forward.5} parent=61 // pred_check
          %p462 = pneg %p75
        $region72: #{etm_forward.5} parent=61 // pred_check_branch
          %464 = sbr.rel (%p462) target = $region74
        $region73: #{etm_forward.5} parent=61 // pred_region
          _
        $region74: #{etm_forward.5} parent=61 // pred_fallthru
          _
        // Predicated region
        $region75: #{etm_forward.5} parent=61 // pred_check
          %p465 = pneg %p96
        $region76: #{etm_forward.5} parent=61 // pred_check_branch
          %467 = sbr.rel (%p465) target = $region78
        $region77: #{etm_forward.5} parent=61 // pred_region
          _
        $region78: #{etm_forward.5} parent=61 // pred_fallthru
          _
        // Predicated region
        $region79: #{etm_forward.5} parent=61 // pred_check
          %p468 = pneg %p75
        $region80: #{etm_forward.5} parent=61 // pred_check_branch
          %470 = sbr.rel (%p468) target = $region82
        $region81: #{etm_forward.5} parent=61 // pred_region
          _
        $region82: #{etm_forward.5} parent=61 // pred_fallthru
          _
        // Predicated region
        $region83: #{etm_forward.5} parent=61 // pred_check
          %p471 = pneg %p96
        $region84: #{etm_forward.5} parent=61 // pred_check_branch
          %473 = sbr.rel (%p471) target = $region86
        $region85: #{etm_forward.5} parent=61 // pred_region
          _
        $region86: #{etm_forward.5} parent=61 // pred_fallthru
          _
      $region62: #{etm_forward.5} parent=5 // pred_fallthru
        _
      %p474 = scmp.le.s32.totalorder 2, %s10
      // Predicated region
      $region87: #{etm_forward.5} parent=5 // pred_check
        %p475 = pneg %p474
      $region88: #{etm_forward.5} parent=5 // pred_check_branch
        %477 = sbr.rel (%p475) target = $region90
      $region89: #{etm_forward.5} parent=5 // pred_region
        %s478 = ssub.s32 %s10, 2
      $region90: #{etm_forward.5} parent=5 // pred_fallthru
        _
    $region6: #{etm_forward.5} parent=1 // loop_footer
      %s14 = sadd.s32 1, %s10
    $region7: #{etm_forward.5} parent=1 // loop_footer_branch
      %9 = sbr.rel target = $region3
    $region8: #{etm_forward.5} parent=1 // loop_exit
      _

// kernel: etm_forward.4
$region0: #{etm_forward.4}
  #allocation0 [shape = 'u32[]', space=smem, size = 0x4, offset = 0x4, fixed_abs, tag = 'smem constant byte address 0x4 - core index']
  #allocation1 [shape = 'u32[144,128]{1,0:T(1,128)}', space=vmem, size = 0x12000, scoped, tag = 'internal scratch']
  #allocation2 [shape = 'f32[16,128]{1,0:T(8,128)}', space=vmem, size = 0x2000, scoped, tag = 'scratch operand']
  %s0 = inlined_call_operand.vmem [shape: bf16[32,512], index: 0, kind: input, shape index: {}]
  %s1 = inlined_call_operand.vmem [shape: bf16[512,128], index: 1, kind: input, shape index: {}]
  %s2 = inlined_call_operand.vmem [shape: f32[1,128], index: 2, kind: input, shape index: {}]
  %s3 = inlined_call_operand.vmem [shape: f32[128,32], index: 3, kind: input, shape index: {}]
  %s4 = inlined_call_operand.vmem [shape: f32[1,32], index: 4, kind: input, shape index: {}]
  %s5 = inlined_call_operand.vmem [shape: f32[32,16], index: 5, kind: output, shape index: {0}]
  %s6 = inlined_call_operand.vmem [shape: f32[32,1], index: 6, kind: output, shape index: {1}]
  %7 = xla_tuple %s5, %s6
  %s8 = sld [smem:[#allocation0]]
  $region107: #{etm_forward.4} parent=0
    _
  %s10 = ssub.s32 1, %s8
  %s11 = scalar_select 0, %s10, %s8
  $region1: #{etm_forward.4} parent=0
    #allocation3 [shape = 'u8[16384]{0}', space=vmem, size = 0x4000, scoped, tag = 'input window, operand 0']
    loop: start=0, step=1, limit=6
    $region2: #{etm_forward.4} parent=1 // loop_pre_header
      _
    $region3: #{etm_forward.4} parent=1 // loop_header
      %s13 = sphi 0, %s17
      %p14 = scmp.ge.s32.totalorder %s13, 6
      %s20 = sphi 0, %s32
      %s21 = sphi 0, %s28
      %s22 = sphi 0, %s20
      %s23 = sphi 0, %s21
      %s24 = sphi 0, %s22
      %s25 = sphi 0, %s23
      %s37 = sphi 0, %s39
      %s40 = sphi 0, %s37
      %s41 = sphi 0, %s40
      %s57 = sphi 0, %s41
      %s63 = sphi 0, %s65
      %s66 = sphi 0, %s63
      %s67 = sphi 0, %s66
      %s83 = sphi 0, %s67
      %s87 = sphi 0, %s87
      %s89 = sphi 0, %s87
      %s90 = sphi 0, %s89
      %s104 = sphi 0, %s90
      %s108 = sphi 0, %s108
      %s110 = sphi 0, %s108
      %s111 = sphi 0, %s110
      %s125 = sphi 0, %s111
      %s129 = sphi 0, %s129
      %s131 = sphi 0, %s129
      %s132 = sphi 0, %s131
      %s146 = sphi 0, %s132
      %s152 = sphi 0, %s154
      %s155 = sphi 0, %s152
      %s156 = sphi 0, %s155
      %s172 = sphi 0, %s156
      %s178 = sphi 0, %s180
      %s181 = sphi 0, %s178
      %s182 = sphi 0, %s181
      %s198 = sphi 0, %s182
    $region4: #{etm_forward.4} parent=1 // loop_header_branch
      %16 = sbr.rel (%p14) target = $region8
    $region5: #{etm_forward.4} parent=1 // loop_body
      %s18 = ssub.s32 %s13, 1
      %s19 = ssub.s32 %s13, 2
      %s26 = sadd.s32 1, %s21
      %p27 = scmp.ge.s32.totalorder %s26, 2
      %s28 = scalar_select %p27, 0, %s26
      %s29 = sadd.s32 1, %s20
      %s30 = scalar_select %p27, %s29, %s20
      %p31 = scmp.ge.s32.totalorder %s30, 2
      %s32 = scalar_select %p31, 0, %s30
      %s33 = ssub.s32 %s20, %s32
      %s34 = ssub.s32 %s21, %s28
      %s35 = sor.u32 %s33, %s34
      %p36 = scmp.eq.s32.totalorder %s35, 0
      %s38 = sadd.s32 %s37, 1
      %s39 = scalar_select %p36, %s37, %s38
      %p42 = pneg %p36
      %p43 = scmp.eq.s32.totalorder %s13, 3
      %p44 = por %p42, %p43
      %p45 = scmp.ne.s32.totalorder %s37, %s40
      %p46 = scmp.eq.s32.totalorder %s13, 0
      %p47 = por %p45, %p46
      %p48 = scmp.ne.s32.totalorder %s37, %s40
      %p49 = scmp.eq.s32.totalorder %s18, 3
      %p50 = por %p48, %p49
      %p51 = scmp.ne.s32.totalorder %s40, %s41
      %p52 = scmp.eq.s32.totalorder %s18, 0
      %p53 = por %p51, %p52
      %p54 = scmp.ne.s32.totalorder %s40, %s41
      %p55 = scmp.eq.s32.totalorder %s19, 3
      %p56 = por %p54, %p55
      %p58 = scmp.ne.s32.totalorder %s41, %s57
      %p59 = scmp.eq.s32.totalorder %s19, 0
      %p60 = por %p58, %p59
      %s61 = ssub.s32 %s21, %s28
      %p62 = scmp.eq.s32.totalorder %s61, 0
      %s64 = sadd.s32 %s63, 1
      %s65 = scalar_select %p62, %s63, %s64
      %p68 = pneg %p62
      %p69 = scmp.eq.s32.totalorder %s13, 3
      %p70 = por %p68, %p69
      %p71 = scmp.ne.s32.totalorder %s63, %s66
      %p72 = scmp.eq.s32.totalorder %s13, 0
      %p73 = por %p71, %p72
      %p74 = scmp.ne.s32.totalorder %s63, %s66
      %p75 = scmp.eq.s32.totalorder %s18, 3
      %p76 = por %p74, %p75
      %p77 = scmp.ne.s32.totalorder %s66, %s67
      %p78 = scmp.eq.s32.totalorder %s18, 0
      %p79 = por %p77, %p78
      %p80 = scmp.ne.s32.totalorder %s66, %s67
      %p81 = scmp.eq.s32.totalorder %s19, 3
      %p82 = por %p80, %p81
      %p84 = scmp.ne.s32.totalorder %s67, %s83
      %p85 = scmp.eq.s32.totalorder %s19, 0
      %p86 = por %p84, %p85
      %s88 = sadd.s32 %s87, 1
      %p91 = scmp.eq.s32.totalorder %s13, 3
      %p92 = scmp.ne.s32.totalorder %s87, %s89
      %p93 = scmp.eq.s32.totalorder %s13, 0
      %p94 = por %p92, %p93
      %p95 = scmp.ne.s32.totalorder %s87, %s89
      %p96 = scmp.eq.s32.totalorder %s18, 3
      %p97 = por %p95, %p96
      %p98 = scmp.ne.s32.totalorder %s89, %s90
      %p99 = scmp.eq.s32.totalorder %s18, 0
      %p100 = por %p98, %p99
      %p101 = scmp.ne.s32.totalorder %s89, %s90
      %p102 = scmp.eq.s32.totalorder %s19, 3
      %p103 = por %p101, %p102
      %p105 = scmp.ne.s32.totalorder %s90, %s104
      %p106 = scmp.eq.s32.totalorder %s19, 0
      %p107 = por %p105, %p106
      %s109 = sadd.s32 %s108, 1
      %p112 = scmp.eq.s32.totalorder %s13, 3
      %p113 = scmp.ne.s32.totalorder %s108, %s110
      %p114 = scmp.eq.s32.totalorder %s13, 0
      %p115 = por %p113, %p114
      %p116 = scmp.ne.s32.totalorder %s108, %s110
      %p117 = scmp.eq.s32.totalorder %s18, 3
      %p118 = por %p116, %p117
      %p119 = scmp.ne.s32.totalorder %s110, %s111
      %p120 = scmp.eq.s32.totalorder %s18, 0
      %p121 = por %p119, %p120
      %p122 = scmp.ne.s32.totalorder %s110, %s111
      %p123 = scmp.eq.s32.totalorder %s19, 3
      %p124 = por %p122, %p123
      %p126 = scmp.ne.s32.totalorder %s111, %s125
      %p127 = scmp.eq.s32.totalorder %s19, 0
      %p128 = por %p126, %p127
      %s130 = sadd.s32 %s129, 1
      %p133 = scmp.eq.s32.totalorder %s13, 3
      %p134 = scmp.ne.s32.totalorder %s129, %s131
      %p135 = scmp.eq.s32.totalorder %s13, 0
      %p136 = por %p134, %p135
      %p137 = scmp.ne.s32.totalorder %s129, %s131
      %p138 = scmp.eq.s32.totalorder %s18, 3
      %p139 = por %p137, %p138
      %p140 = scmp.ne.s32.totalorder %s131, %s132
      %p141 = scmp.eq.s32.totalorder %s18, 0
      %p142 = por %p140, %p141
      %p143 = scmp.ne.s32.totalorder %s131, %s132
      %p144 = scmp.eq.s32.totalorder %s19, 3
      %p145 = por %p143, %p144
      %p147 = scmp.ne.s32.totalorder %s132, %s146
      %p148 = scmp.eq.s32.totalorder %s19, 0
      %p149 = por %p147, %p148
      %s150 = ssub.s32 %s20, %s32
      %p151 = scmp.eq.s32.totalorder %s150, 0
      %s153 = sadd.s32 %s152, 1
      %s154 = scalar_select %p151, %s152, %s153
      %p157 = pneg %p151
      %p158 = scmp.eq.s32.totalorder %s13, 3
      %p159 = por %p157, %p158
      %p160 = scmp.ne.s32.totalorder %s152, %s155
      %p161 = scmp.eq.s32.totalorder %s13, 0
      %p162 = por %p160, %p161
      %p163 = scmp.ne.s32.totalorder %s152, %s155
      %p164 = scmp.eq.s32.totalorder %s18, 3
      %p165 = por %p163, %p164
      %p166 = scmp.ne.s32.totalorder %s155, %s156
      %p167 = scmp.eq.s32.totalorder %s18, 0
      %p168 = por %p166, %p167
      %p169 = scmp.ne.s32.totalorder %s155, %s156
      %p170 = scmp.eq.s32.totalorder %s19, 3
      %p171 = por %p169, %p170
      %p173 = scmp.ne.s32.totalorder %s156, %s172
      %p174 = scmp.eq.s32.totalorder %s19, 0
      %p175 = por %p173, %p174
      %s176 = ssub.s32 %s20, %s32
      %p177 = scmp.eq.s32.totalorder %s176, 0
      %s179 = sadd.s32 %s178, 1
      %s180 = scalar_select %p177, %s178, %s179
      %p183 = pneg %p177
      %p184 = scmp.eq.s32.totalorder %s13, 3
      %p185 = por %p183, %p184
      %p186 = scmp.ne.s32.totalorder %s178, %s181
      %p187 = scmp.eq.s32.totalorder %s13, 0
      %p188 = por %p186, %p187
      %p189 = scmp.ne.s32.totalorder %s178, %s181
      %p190 = scmp.eq.s32.totalorder %s18, 3
      %p191 = por %p189, %p190
      %p192 = scmp.ne.s32.totalorder %s181, %s182
      %p193 = scmp.eq.s32.totalorder %s18, 0
      %p194 = por %p192, %p193
      %p195 = scmp.ne.s32.totalorder %s181, %s182
      %p196 = scmp.eq.s32.totalorder %s19, 3
      %p197 = por %p195, %p196
      %p199 = scmp.ne.s32.totalorder %s182, %s198
      %p200 = scmp.eq.s32.totalorder %s19, 0
      %p201 = por %p199, %p200
      %p202 = scmp.le.s32.totalorder 1, %s13
      %p203 = scmp.lt.s32.totalorder %s13, 5
      %p204 = pnand %p202, %p203
      %p205 = pneg %p204
      // Predicated region
      $region9: #{etm_forward.4} parent=5 // pred_check
        _
      $region10: #{etm_forward.4} parent=5 // pred_check_branch
        %207 = sbr.rel (%p204) target = $region12
      $region11: #{etm_forward.4} parent=5 // pred_region
        %s208 = ssub.s32 %s13, 1
        // Predicated region
        $region13: #{etm_forward.4} parent=11 // pred_check
          %p209 = pneg %p100
        $region14: #{etm_forward.4} parent=11 // pred_check_branch
          %211 = sbr.rel (%p209) target = $region16
        $region15: #{etm_forward.4} parent=11 // pred_region
          _
        $region16: #{etm_forward.4} parent=11 // pred_fallthru
          _
        // Predicated region
        $region17: #{etm_forward.4} parent=11 // pred_check
          %p212 = pneg %p121
        $region18: #{etm_forward.4} parent=11 // pred_check_branch
          %214 = sbr.rel (%p212) target = $region20
        $region19: #{etm_forward.4} parent=11 // pred_region
          _
        $region20: #{etm_forward.4} parent=11 // pred_fallthru
          _
        // Predicated region
        $region21: #{etm_forward.4} parent=11 // pred_check
          %p215 = pneg %p142
        $region22: #{etm_forward.4} parent=11 // pred_check_branch
          %217 = sbr.rel (%p215) target = $region24
        $region23: #{etm_forward.4} parent=11 // pred_region
          _
        $region24: #{etm_forward.4} parent=11 // pred_fallthru
          _
      $region12: #{etm_forward.4} parent=5 // pred_fallthru
        _
      %p218 = scmp.lt.s32.totalorder %s13, 4
      // Predicated region
      $region25: #{etm_forward.4} parent=5 // pred_check
        %p219 = pneg %p218
      $region26: #{etm_forward.4} parent=5 // pred_check_branch
        %221 = sbr.rel (%p219) target = $region28
      $region27: #{etm_forward.4} parent=5 // pred_region
        // Predicated region
        $region29: #{etm_forward.4} parent=27 // pred_check
          %p222 = pneg %p47
        $region30: #{etm_forward.4} parent=27 // pred_check_branch
          %224 = sbr.rel (%p222) target = $region32
        $region31: #{etm_forward.4} parent=27 // pred_region
          %s225 = sand.u32 %s37, 1
          %s226 = sand.u32 %s37, 1
          %s227 = smul.addr %s226, 16
          %s228 = scalar_lea.vmem [#allocation3], %s227
          %s229 = smul.u32 2, %s20
          %s230 = smul.u32 2, %s21
          %s231 = smul.addr %s229, 4
          %s232 = sadd.s32 %s230, %s231
          %s233 = smul.addr %s232, 4
          %s234 = scalar_lea.vmem %s0, %s233
          // Predicated region
          $region33: #{etm_forward.4} parent=31 // pred_check
            _
          $region34: #{etm_forward.4} parent=31 // pred_check_branch
            %236 = sbr.rel (0) target = $region36
          $region35: #{etm_forward.4} parent=31 // pred_region
            // Predicated region
            $region37: #{etm_forward.4} parent=35 // pred_check
              _
            $region38: #{etm_forward.4} parent=35 // pred_check_branch
              %238 = sbr.rel (0) target = $region40
            $region39: #{etm_forward.4} parent=35 // pred_region
              // Predicated region
              $region52: #{etm_forward.4} parent=39 // pred_check
                _
              $region53: #{etm_forward.4} parent=39 // pred_check_branch
                %255 = sbr.rel (0) target = $region55
              $region54: #{etm_forward.4} parent=39 // pred_region
                loop: start=0, step=1, limit=1
                $region56: #{etm_forward.4} parent=54 // loop_pre_header
                  _
                $region57: #{etm_forward.4} parent=54 // loop_header
                  %s257 = sphi 0, %s261
                  %p258 = scmp.ge.s32.totalorder %s257, 1
                  %s262 = sphi %s234, %s234
                  %s263 = sphi %s228, %s228
                $region58: #{etm_forward.4} parent=54 // loop_header_branch
                  %260 = sbr.rel (%p258) target = $region62
                $region59: #{etm_forward.4} parent=54 // loop_body
                  %v264 = vld [vmem:[%s262] sm:$0xff]
                  %265 = vst [vmem:[%s263] sm:$0xff] %v264
                  %v266 = vld [vmem:[%s262 + $0x10] sm:$0xff]
                  %267 = vst [vmem:[%s263 + $0x8] sm:$0xff] %v266
                $region60: #{etm_forward.4} parent=54 // loop_footer
                  %s261 = sadd.s32 1, %s257
                $region61: #{etm_forward.4} parent=54 // loop_footer_branch
                  %256 = sbr.rel target = $region57
                $region62: #{etm_forward.4} parent=54 // loop_exit
                  _
              $region55: #{etm_forward.4} parent=39 // pred_fallthru
                _
              // Predicated region
              $region63: #{etm_forward.4} parent=39 // pred_check
                _
              $region64: #{etm_forward.4} parent=39 // pred_check_branch
                %269 = sbr.rel target = $region66
              $region65: #{etm_forward.4} parent=39 // pred_region
                _
              $region66: #{etm_forward.4} parent=39 // pred_fallthru
                _
            $region40: #{etm_forward.4} parent=35 // pred_fallthru
              _
            // Predicated region
            $region41: #{etm_forward.4} parent=35 // pred_check
              _
            $region42: #{etm_forward.4} parent=35 // pred_check_branch
              %240 = sbr.rel target = $region44
            $region43: #{etm_forward.4} parent=35 // pred_region
              loop: start=0, step=1, limit=1
              $region45: #{etm_forward.4} parent=43 // loop_pre_header
                _
              $region46: #{etm_forward.4} parent=43 // loop_header
                %s243 = sphi 0, %s247
                %p244 = scmp.ge.s32.totalorder %s243, 1
                %s248 = sphi %s234, %s234
                %s249 = sphi %s228, %s228
              $region47: #{etm_forward.4} parent=43 // loop_header_branch
                %246 = sbr.rel (%p244) target = $region51
              $region48: #{etm_forward.4} parent=43 // loop_body
                %v250 = vld [vmem:[%s248] sm:$0xff]
                %251 = vst [vmem:[%s249] sm:$0xff] %v250
                %v252 = vld [vmem:[%s248 + $0x10] sm:$0xff]
                %253 = vst [vmem:[%s249 + $0x8] sm:$0xff] %v252
              $region49: #{etm_forward.4} parent=43 // loop_footer
                %s247 = sadd.s32 1, %s243
              $region50: #{etm_forward.4} parent=43 // loop_footer_branch
                %242 = sbr.rel target = $region46
              $region51: #{etm_forward.4} parent=43 // loop_exit
                _
            $region44: #{etm_forward.4} parent=35 // pred_fallthru
              _
          $region36: #{etm_forward.4} parent=31 // pred_fallthru
            _
          %270 = vnop
        $region32: #{etm_forward.4} parent=27 // pred_fallthru
          _
        // Predicated region
        $region67: #{etm_forward.4} parent=27 // pred_check
          %p271 = pneg %p73
        $region68: #{etm_forward.4} parent=27 // pred_check_branch
          %273 = sbr.rel (%p271) target = $region70
        $region69: #{etm_forward.4} parent=27 // pred_region
          %s274 = smul.u32 32, %s21
          %p275 = scmp.lt.s32.totalorder %s274, 63
          %s276 = scalar_select %p275, %s274, 63
          %s277 = smul.addr %s276, 4
          %s278 = scalar_lea.vmem %s1, %s277
          %s279 = smul.u32 32, %s21
        $region70: #{etm_forward.4} parent=27 // pred_fallthru
          _
      $region28: #{etm_forward.4} parent=5 // pred_fallthru
        _
      %p280 = scmp.le.s32.totalorder 1, %s13
      %p281 = scmp.lt.s32.totalorder %s13, 5
      %p282 = pnand %p280, %p281
      %p283 = pneg %p282
      // Predicated region
      $region71: #{etm_forward.4} parent=5 // pred_check
        _
      $region72: #{etm_forward.4} parent=5 // pred_check_branch
        %285 = sbr.rel (%p282) target = $region74
      $region73: #{etm_forward.4} parent=5 // pred_region
        %s286 = ssub.s32 %s13, 1
        %s287 = sand.u32 %s40, 1
        %s288 = sand.u32 %s40, 1
        %s289 = smul.addr %s288, 16
        %s290 = scalar_lea.vmem [#allocation3], %s289
        // Predicated region
        $region75: #{etm_forward.4} parent=73 // pred_check
          %p291 = pneg %p53
        $region76: #{etm_forward.4} parent=73 // pred_check_branch
          %293 = sbr.rel (%p291) target = $region78
        $region77: #{etm_forward.4} parent=73 // pred_region
          _
        $region78: #{etm_forward.4} parent=73 // pred_fallthru
          _
        %s294 = sand.u32 %s40, 1
        %s295 = sand.u32 %s40, 1
        %s296 = smul.addr %s295, 16
        %s297 = scalar_lea.vmem [#allocation3], %s296
        %p298 = pneg %p53
        %p299 = pneg %p50
        %s300 = smul.u32 32, %s23
        %p301 = scmp.lt.s32.totalorder %s300, 63
        %s302 = scalar_select %p301, %s300, 63
        %s303 = smul.addr %s302, 4
        %s304 = scalar_lea.vmem %s1, %s303
        %p305 = pneg %p79
        %p306 = pneg %p76
        %p307 = pneg %p100
        %p308 = pneg %p97
        %p309 = pneg %p121
        %p310 = pneg %p118
        %p311 = pneg %p142
        %p312 = pneg %p139
        %p313 = pneg %p168
        %p314 = pneg %p165
        %s315 = smul.u32 2, %s22
        %p316 = scmp.lt.s32.totalorder %s315, 3
        %s317 = scalar_select %p316, %s315, 3
        %s318 = smul.addr %s317, 8
        %s319 = scalar_lea.vmem %s5, %s318
        %p320 = pneg %p194
        %p321 = pneg %p191
        %s322 = smul.u32 2, %s22
        %p323 = scmp.lt.s32.totalorder %s322, 3
        %s324 = scalar_select %p323, %s322, 3
        %s325 = smul.addr %s324, 8
        %s326 = scalar_lea.vmem %s6, %s325
        %s327 = smul.u32 2, %s22
        %s328 = smul.u32 2, %s23
        %s329 = smul.u32 32, %s23
        %p330 = scmp.lt.s32.totalorder %s329, 63
        %s331 = scalar_select %p330, %s329, 63
        %s332 = smul.addr %s331, 4
        %s333 = scalar_lea.vmem %s1, %s332
        %s334 = smul.u32 32, %s23
        %s335 = smul.u32 2, %s22
        %p336 = scmp.lt.s32.totalorder %s335, 3
        %s337 = scalar_select %p336, %s335, 3
        %s338 = smul.addr %s337, 8
        %s339 = scalar_lea.vmem %s5, %s338
        %s340 = smul.u32 2, %s22
        %s341 = smul.u32 2, %s22
        %p342 = scmp.lt.s32.totalorder %s341, 3
        %s343 = scalar_select %p342, %s341, 3
        %s344 = smul.addr %s343, 8
        %s345 = scalar_lea.vmem %s6, %s344
        %s346 = smul.u32 2, %s22
        %p348 = scmp.eq.s32.totalorder %s23, 0
        // Predicated region
        $region79: #{etm_forward.4} parent=73 // pred_check
          %p349 = pneg %p348
        $region80: #{etm_forward.4} parent=73 // pred_check_branch
          %351 = sbr.rel (%p349) target = $region82
        $region81: #{etm_forward.4} parent=73 // pred_region
          %352 = vst [vmem:[#allocation2] sm:$0xff] 0.0
          %353 = vst [vmem:[#allocation2 + $0x8] sm:$0xff] 0.0
        $region82: #{etm_forward.4} parent=73 // pred_fallthru
          _
        %v354 = vld [vmem:[#allocation2] sm:$0xff]
        %v355 = vld [vmem:[#allocation2 + $0x8] sm:$0xff]
        %v356 = vld [vmem:[%s290] sm:$0xff]
        %v357 = vld [vmem:[%s290 + $0x8] sm:$0xff]
        %v358 = vld [vmem:[%s333] sm:$0xf]
        %v359 = vld [vmem:[%s333 + $0x4] sm:$0xf]
        %v360 = vld [vmem:[%s333 + $0x8] sm:$0xf]
        %v361 = vld [vmem:[%s333 + $0xc] sm:$0xf]
        %v362 = vld [vmem:[%s333 + $0x10] sm:$0xf]
        %v363 = vld [vmem:[%s333 + $0x14] sm:$0xf]
        %v364 = vld [vmem:[%s333 + $0x18] sm:$0xf]
        %v365 = vld [vmem:[%s333 + $0x1c] sm:$0xf]
        %v366 = vld [vmem:[%s333 + $0x20] sm:$0xf]
        %v367 = vld [vmem:[%s333 + $0x24] sm:$0xf]
        %v368 = vld [vmem:[%s333 + $0x28] sm:$0xf]
        %v369 = vld [vmem:[%s333 + $0x2c] sm:$0xf]
        %v370 = vld [vmem:[%s333 + $0x30] sm:$0xf]
        %v371 = vld [vmem:[%s333 + $0x34] sm:$0xf]
        %v372 = vld [vmem:[%s333 + $0x38] sm:$0xf]
        %v373 = vld [vmem:[%s333 + $0x3c] sm:$0xf]
        %v374 = vld [vmem:[%s333 + $0x40] sm:$0xf]
        %v375 = vld [vmem:[%s333 + $0x44] sm:$0xf]
        %v376 = vld [vmem:[%s333 + $0x48] sm:$0xf]
        %v377 = vld [vmem:[%s333 + $0x4c] sm:$0xf]
        %v378 = vld [vmem:[%s333 + $0x50] sm:$0xf]
        %v379 = vld [vmem:[%s333 + $0x54] sm:$0xf]
        %v380 = vld [vmem:[%s333 + $0x58] sm:$0xf]
        %v381 = vld [vmem:[%s333 + $0x5c] sm:$0xf]
        %v382 = vld [vmem:[%s333 + $0x60] sm:$0xf]
        %v383 = vld [vmem:[%s333 + $0x64] sm:$0xf]
        %v384 = vld [vmem:[%s333 + $0x68] sm:$0xf]
        %v385 = vld [vmem:[%s333 + $0x6c] sm:$0xf]
        %v386 = vld [vmem:[%s333 + $0x70] sm:$0xf]
        %v387 = vld [vmem:[%s333 + $0x74] sm:$0xf]
        %v388 = vld [vmem:[%s333 + $0x78] sm:$0xf]
        %v389 = vld [vmem:[%s333 + $0x7c] sm:$0xf]
        %v392 = vunpack.c.l.b16 %v356
        %v393 = vunpack.c.h.b16 %v356
        %v394 = vunpack.c.l.b16 %v357
        %v395 = vunpack.c.h.b16 %v357
        %v396 = vpack.c.b16 %v394, %v392
        %v397 = vpack.c.b16 %v395, %v393
        %v432 = vunpack.c.l.b16 %v358
        %v433 = vunpack.c.l.b16 %v359
        %v434 = vunpack.c.l.b16 %v360
        %v435 = vunpack.c.l.b16 %v361
        %v436 = vunpack.c.l.b16 %v362
        %v437 = vunpack.c.l.b16 %v363
        %v438 = vunpack.c.l.b16 %v364
        %v439 = vunpack.c.l.b16 %v365
        %v440 = vunpack.c.l.b16 %v366
        %v441 = vunpack.c.l.b16 %v367
        %v442 = vunpack.c.l.b16 %v368
        %v443 = vunpack.c.l.b16 %v369
        %v444 = vunpack.c.l.b16 %v370
        %v445 = vunpack.c.l.b16 %v371
        %v446 = vunpack.c.l.b16 %v372
        %v447 = vunpack.c.l.b16 %v373
        %v448 = vunpack.c.l.b16 %v374
        %v449 = vunpack.c.l.b16 %v375
        %v450 = vunpack.c.l.b16 %v376
        %v451 = vunpack.c.l.b16 %v377
        %v452 = vunpack.c.l.b16 %v378
        %v453 = vunpack.c.l.b16 %v379
        %v454 = vunpack.c.l.b16 %v380
        %v455 = vunpack.c.l.b16 %v381
        %v456 = vunpack.c.l.b16 %v382
        %v457 = vunpack.c.l.b16 %v383
        %v458 = vunpack.c.l.b16 %v384
        %v459 = vunpack.c.l.b16 %v385
        %v460 = vunpack.c.l.b16 %v386
        %v461 = vunpack.c.l.b16 %v387
        %v462 = vunpack.c.l.b16 %v388
        %v463 = vunpack.c.l.b16 %v389
        %v464 = vpack.c.b16 %v433, %v432
        %v465 = vpack.c.b16 %v435, %v434
        %v466 = vpack.c.b16 %v437, %v436
        %v467 = vpack.c.b16 %v439, %v438
        %v468 = vpack.c.b16 %v441, %v440
        %v469 = vpack.c.b16 %v443, %v442
        %v470 = vpack.c.b16 %v445, %v444
        %v471 = vpack.c.b16 %v447, %v446
        %v472 = vpack.c.b16 %v449, %v448
        %v473 = vpack.c.b16 %v451, %v450
        %v474 = vpack.c.b16 %v453, %v452
        %v475 = vpack.c.b16 %v455, %v454
        %v476 = vpack.c.b16 %v457, %v456
        %v477 = vpack.c.b16 %v459, %v458
        %v478 = vpack.c.b16 %v461, %v460
        %v479 = vpack.c.b16 %v463, %v462
        %496 = vmatprep.subr.bf16.mxu0 0
        %497 = vmatpush1.bf16.msra.mxu0 %v464
        %498 = vmatprep.subr.bf16.mxu0 0
        %499 = vmatpush1.bf16.msra.mxu0 %v465
        %500 = vmatprep.subr.bf16.mxu0 0
        %501 = vmatpush1.bf16.msra.mxu0 %v466
        %502 = vmatprep.subr.bf16.mxu0 0
        %503 = vmatpush1.bf16.msra.mxu0 %v467
        %504 = vmatprep.subr.bf16.mxu0 0
        %505 = vmatpush1.bf16.msra.mxu0 %v468
        %506 = vmatprep.subr.bf16.mxu0 0
        %507 = vmatpush1.bf16.msra.mxu0 %v469
        %508 = vmatprep.subr.bf16.mxu0 0
        %509 = vmatpush1.bf16.msra.mxu0 %v470
        %510 = vmatprep.subr.bf16.mxu0 0
        %511 = vmatpush1.bf16.msra.mxu0 %v471
        %512 = vmatprep.subr.bf16.mxu0 0
        %513 = vmatpush1.bf16.msra.mxu0 %v472
        %514 = vmatprep.subr.bf16.mxu0 0
        %515 = vmatpush1.bf16.msra.mxu0 %v473
        %516 = vmatprep.subr.bf16.mxu0 0
        %517 = vmatpush1.bf16.msra.mxu0 %v474
        %518 = vmatprep.subr.bf16.mxu0 0
        %519 = vmatpush1.bf16.msra.mxu0 %v475
        %520 = vmatprep.subr.bf16.mxu0 0
        %521 = vmatpush1.bf16.msra.mxu0 %v476
        %522 = vmatprep.subr.bf16.mxu0 0
        %523 = vmatpush1.bf16.msra.mxu0 %v477
        %524 = vmatprep.subr.bf16.mxu0 0
        %525 = vmatpush1.bf16.msra.mxu0 %v478
        %526 = vmatprep.subr.bf16.mxu0 0
        %527 = vmatpush1.bf16.msra.mxu0 %v479
        %528 = vmatprep.mubr.bf16.mxu0 %v397
        %529 = vmatmul.mubr.bf16.gmra.mrb[0].mxu0 %v396
        %v530 = vpop.f32.mrb[0].mxu0
        %v531 = vadd.f32 0.0, %v530
        %v532 = vpop.f32.mrb[0].mxu0
        %v533 = vpop.f32.mrb[0].mxu0
        %v534 = vadd.f32 0.0, %v533
        %v535 = vpop.f32.mrb[0].mxu0
        %536 = vdwg.mxu0
        %v537 = vadd.f32 %v354, %v531
        %v538 = vadd.f32 %v355, %v534
        %539 = vst [vmem:[#allocation2] sm:$0xff] %v537
        %540 = vst [vmem:[#allocation2 + $0x8] sm:$0xff] %v538
        %p541 = scmp.eq.s32.totalorder %s23, 1
        // Predicated region
        $region83: #{etm_forward.4} parent=73 // pred_check
          %p542 = pneg %p541
        $region84: #{etm_forward.4} parent=73 // pred_check_branch
          %544 = sbr.rel (%p542) target = $region86
        $region85: #{etm_forward.4} parent=73 // pred_region
          %v545 = vld [vmem:[#allocation2] sm:$0xff]
          %v546 = vld [vmem:[#allocation2 + $0x8] sm:$0xff]
          %v547 = vld [vmem:[%s2] sm:$0x1]
          %v549 = vlaneseq
          %v550 = vshrl.u32 %v549, 7
          %v551 = vsub.s32 0, %v550
          %v552 = vrot.slane %v547, %v551
          %v554 = vadd.f32 %v545, %v552
          %v555 = vadd.f32 %v546, %v552
          %v556 = vmax.f32 %v554, 0.0
          %v557 = vmax.f32 %v555, 0.0
          %v558 = vld [vmem:[%s3] sm:$0xff]
          %v559 = vld [vmem:[%s3 + $0x8] sm:$0xff]
          %v560 = vld [vmem:[%s3 + $0x10] sm:$0xff]
          %v561 = vld [vmem:[%s3 + $0x18] sm:$0xff]
          %v562 = vld [vmem:[%s3 + $0x20] sm:$0xff]
          %v563 = vld [vmem:[%s3 + $0x28] sm:$0xff]
          %v564 = vld [vmem:[%s3 + $0x30] sm:$0xff]
          %v565 = vld [vmem:[%s3 + $0x38] sm:$0xff]
          %v566 = vld [vmem:[%s3 + $0x40] sm:$0xff]
          %v567 = vld [vmem:[%s3 + $0x48] sm:$0xff]
          %v568 = vld [vmem:[%s3 + $0x50] sm:$0xff]
          %v569 = vld [vmem:[%s3 + $0x58] sm:$0xff]
          %v570 = vld [vmem:[%s3 + $0x60] sm:$0xff]
          %v571 = vld [vmem:[%s3 + $0x68] sm:$0xff]
          %v572 = vld [vmem:[%s3 + $0x70] sm:$0xff]
          %v573 = vld [vmem:[%s3 + $0x78] sm:$0xff]
          %v574 = vld [vmem:[%s4] sm:$0x1]
          %v576 = vlaneseq
          %v577 = vshrl.u32 %v576, 7
          %v578 = vsub.s32 0, %v577
          %v579 = vrot.slane %v574, %v578
          %581 = vmatprep.subr.mxu0 0.0
          %582 = vmatpush1.msra.mxu0 %v558
          %583 = vmatprep.subr.mxu0 0.0
          %584 = vmatpush1.msra.mxu0 %v559
          %585 = vmatprep.subr.mxu0 0.0
          %586 = vmatpush1.msra.mxu0 %v560
          %587 = vmatprep.subr.mxu0 0.0
          %588 = vmatpush1.msra.mxu0 %v561
          %589 = vmatprep.subr.mxu0 0.0
          %590 = vmatpush1.msra.mxu0 %v562
          %591 = vmatprep.subr.mxu0 0.0
          %592 = vmatpush1.msra.mxu0 %v563
          %593 = vmatprep.subr.mxu0 0.0
          %594 = vmatpush1.msra.mxu0 %v564
          %595 = vmatprep.subr.mxu0 0.0
          %596 = vmatpush1.msra.mxu0 %v565
          %597 = vmatprep.subr.mxu0 0.0
          %598 = vmatpush1.msra.mxu0 %v566
          %599 = vmatprep.subr.mxu0 0.0
          %600 = vmatpush1.msra.mxu0 %v567
          %601 = vmatprep.subr.mxu0 0.0
          %602 = vmatpush1.msra.mxu0 %v568
          %603 = vmatprep.subr.mxu0 0.0
          %604 = vmatpush1.msra.mxu0 %v569
          %605 = vmatprep.subr.mxu0 0.0
          %606 = vmatpush1.msra.mxu0 %v570
          %607 = vmatprep.subr.mxu0 0.0
          %608 = vmatpush1.msra.mxu0 %v571
          %609 = vmatprep.subr.mxu0 0.0
          %610 = vmatpush1.msra.mxu0 %v572
          %611 = vmatprep.subr.mxu0 0.0
          %612 = vmatpush1.msra.mxu0 %v573
          %613 = vmatprep.subr.mxu0 0.0
          %614 = vmatpush1.msra.mxu0 0.0
          %615 = vmatprep.subr.mxu0 0.0
          %616 = vmatpush1.msra.mxu0 0.0
          %617 = vmatprep.subr.mxu0 0.0
          %618 = vmatpush1.msra.mxu0 0.0
          %619 = vmatprep.subr.mxu0 0.0
          %620 = vmatpush1.msra.mxu0 0.0
          %621 = vmatprep.subr.mxu0 0.0
          %622 = vmatpush1.msra.mxu0 0.0
          %623 = vmatprep.subr.mxu0 0.0
          %624 = vmatpush1.msra.mxu0 0.0
          %625 = vmatprep.subr.mxu0 0.0
          %626 = vmatpush1.msra.mxu0 0.0
          %627 = vmatprep.subr.mxu0 0.0
          %628 = vmatpush1.msra.mxu0 0.0
          %629 = vmatprep.subr.mxu0 0.0
          %630 = vmatpush1.msra.mxu0 0.0
          %631 = vmatprep.subr.mxu0 0.0
          %632 = vmatpush1.msra.mxu0 0.0
          %633 = vmatprep.subr.mxu0 0.0
          %634 = vmatpush1.msra.mxu0 0.0
          %635 = vmatprep.subr.mxu0 0.0
          %636 = vmatpush1.msra.mxu0 0.0
          %637 = vmatprep.subr.mxu0 0.0
          %638 = vmatpush1.msra.mxu0 0.0
          %639 = vmatprep.subr.mxu0 0.0
          %640 = vmatpush1.msra.mxu0 0.0
          %641 = vmatprep.subr.mxu0 0.0
          %642 = vmatpush1.msra.mxu0 0.0
          %643 = vmatprep.subr.mxu0 0.0
          %644 = vmatpush1.msra.mxu0 0.0
          %645 = vmatprep.mubr.f32.mxu0 0.0
          %646 = vmatmul.mubr.f32.gmra.mrb[0].mxu0 %v556
          %v647 = vpop.f32.mrb[0].mxu0
          %v648 = vadd.f32 %v579, %v647
          %v649 = vpop.f32.mrb[0].mxu0
          %650 = vmatprep.mubr.f32.mxu0 0.0
          %651 = vmatmul.mubr.f32.gmra.mrb[0].mxu0 %v557
          %v652 = vpop.f32.mrb[0].mxu0
          %v653 = vadd.f32 %v579, %v652
          %v654 = vpop.f32.mrb[0].mxu0
          %655 = vdwg.mxu0
          %v656 = vadd.f32 %v648, 1.0
          %v657 = vadd.f32 %v653, 1.0
          %v658 = vmul.f32 %v648, %v648
          %v659 = vmul.f32 %v653, %v653
          %662 = vrot.lane.b32.xlu0 %v658, 16
          %v663 = vpop.permute.xlu0 %662
          %664 = vrot.lane.b32.xlu0 %v659, 16
          %v665 = vpop.permute.xlu0 %664
          %v668 = vsub.f32 %v656, %v663
          %v669 = vsub.f32 %v657, %v665
          %v670 = vmul.f32 %v648, 1.442695
          %v671 = vpow.pop %v670
          %v672 = vmul.f32 %v653, 1.442695
          %v673 = vpow.pop %v672
          %v674 = vsub.f32 %v668, %v671
          %v675 = vsub.f32 %v669, %v673
          %678 = vrot.lane.b32.xlu0 %v674, 112
          %v679 = vpop.permute.xlu0 %678
          %680 = vrot.lane.b32.xlu0 %v675, 112
          %v681 = vpop.permute.xlu0 %680
          %vm684 = vcmask 130048
          %v685 = vsel %vm684, %v679, 0.0
          %686 = vadd.xlane.f32.xlu0 %v685
          %v687 = vpop.xlane.xlu0 %686
          %v688 = vsel %vm684, %v681, 0.0
          %689 = vadd.xlane.f32.xlu0 %v688
          %v690 = vpop.xlane.xlu0 %689
          %v691 = vmul.f32 %v687, -0.5
          %v692 = vmul.f32 %v690, -0.5
          %vm693 = vcmask 7168
          %694 = vst.msk [vmem:[%s345] sm:$0xff] %vm693, %v691
          %695 = vst.msk [vmem:[%s345 + $0x8] sm:$0xff] %vm693, %v692
          %v696 = vsel %vm684, %v648, -inf
          %697 = vmax.xlane.f32.xlu0 %v696
          %v698 = vpop.xlane.xlu0 %697
          %v699 = vsel %vm684, %v653, -inf
          %700 = vmax.xlane.f32.xlu0 %v699
          %v701 = vpop.xlane.xlu0 %700
          %v702 = vsub.f32 %v648, %v698
          %v703 = vsub.f32 %v653, %v701
          %v704 = vmul.f32 %v702, 1.442695
          %v705 = vpow.pop %v704
          %v706 = vmul.f32 %v703, 1.442695
          %v707 = vpow.pop %v706
          %v708 = vsel %vm684, %v705, 0.0
          %709 = vadd.xlane.f32.xlu0 %v708
          %v710 = vpop.xlane.xlu0 %709
          %v711 = vsel %vm684, %v707, 0.0
          %712 = vadd.xlane.f32.xlu0 %v711
          %v713 = vpop.xlane.xlu0 %712
          %v714 = vrcp.pop %v710
          %v715 = vmul.f32 %v705, %v714
          %v716 = vrcp.pop %v713
          %v717 = vmul.f32 %v707, %v716
          %718 = vst.msk [vmem:[%s339] sm:$0xff] %vm684, %v715
          %719 = vst.msk [vmem:[%s339 + $0x8] sm:$0xff] %vm684, %v717
        $region86: #{etm_forward.4} parent=73 // pred_fallthru
          _
        %s720 = smul.u32 2, %s22
        %p721 = scmp.lt.s32.totalorder %s720, 3
        %s722 = scalar_select %p721, %s720, 3
        %s723 = smul.addr %s722, 8
        %s724 = scalar_lea.vmem %s5, %s723
        %s725 = smul.u32 2, %s22
        %p726 = scmp.lt.s32.totalorder %s725, 3
        %s727 = scalar_select %p726, %s725, 3
        %s728 = smul.addr %s727, 8
        %s729 = scalar_lea.vmem %s6, %s728
        // Predicated region
        $region87: #{etm_forward.4} parent=73 // pred_check
          %p730 = pneg %p165
        $region88: #{etm_forward.4} parent=73 // pred_check_branch
          %732 = sbr.rel (%p730) target = $region90
        $region89: #{etm_forward.4} parent=73 // pred_region
          %s733 = smul.u32 2, %s22
        $region90: #{etm_forward.4} parent=73 // pred_fallthru
          _
        // Predicated region
        $region91: #{etm_forward.4} parent=73 // pred_check
          %p734 = pneg %p191
        $region92: #{etm_forward.4} parent=73 // pred_check_branch
          %736 = sbr.rel (%p734) target = $region94
        $region93: #{etm_forward.4} parent=73 // pred_region
          %s737 = smul.u32 2, %s22
        $region94: #{etm_forward.4} parent=73 // pred_fallthru
          _
      $region74: #{etm_forward.4} parent=5 // pred_fallthru
        _
      %p738 = scmp.le.s32.totalorder 2, %s13
      // Predicated region
      $region95: #{etm_forward.4} parent=5 // pred_check
        %p739 = pneg %p738
      $region96: #{etm_forward.4} parent=5 // pred_check_branch
        %741 = sbr.rel (%p739) target = $region98
      $region97: #{etm_forward.4} parent=5 // pred_region
        %s742 = ssub.s32 %s13, 2
        // Predicated region
        $region99: #{etm_forward.4} parent=97 // pred_check
          %p743 = pneg %p171
        $region100: #{etm_forward.4} parent=97 // pred_check_branch
          %745 = sbr.rel (%p743) target = $region102
        $region101: #{etm_forward.4} parent=97 // pred_region
          %s746 = smul.u32 2, %s24
          %p747 = scmp.lt.s32.totalorder %s746, 3
          %s748 = scalar_select %p747, %s746, 3
          %s749 = smul.addr %s748, 8
          %s750 = scalar_lea.vmem %s5, %s749
        $region102: #{etm_forward.4} parent=97 // pred_fallthru
          _
        // Predicated region
        $region103: #{etm_forward.4} parent=97 // pred_check
          %p751 = pneg %p197
        $region104: #{etm_forward.4} parent=97 // pred_check_branch
          %753 = sbr.rel (%p751) target = $region106
        $region105: #{etm_forward.4} parent=97 // pred_region
          %s754 = smul.u32 2, %s24
          %p755 = scmp.lt.s32.totalorder %s754, 3
          %s756 = scalar_select %p755, %s754, 3
          %s757 = smul.addr %s756, 8
          %s758 = scalar_lea.vmem %s6, %s757
        $region106: #{etm_forward.4} parent=97 // pred_fallthru
          _
      $region98: #{etm_forward.4} parent=5 // pred_fallthru
        _
    $region6: #{etm_forward.4} parent=1 // loop_footer
      %s17 = sadd.s32 1, %s13
    $region7: #{etm_forward.4} parent=1 // loop_footer_branch
      %12 = sbr.rel target = $region3
    $region8: #{etm_forward.4} parent=1 // loop_exit
      _

</llo_original>
